<compile_context>
chip_gen: v7x
topology: tpu7x:2x2x1
jax: 0.10.0
libtpu: 0.0.40
codegen_flags: <defaults>
</compile_context>

<pallas_src>
import functools

import jax
import jax.numpy as jnp
from jax.experimental import pallas as pl
from jax.experimental.pallas import tpu as pltpu

_VMEM_LIMIT = 48 * 1024 * 1024  # safe on v7x (64 MiB physical), generous on v5e/v6e


def _conv_stats_kernel(xp_ref, w_ref, b_ref, y_ref, stats_ref, *, OH, OW, KH, KW):
    """Stride-1 conv (+bias) for one batch element, plus per-batch channel stats.

    xp_ref:    (1, Hp, Wp, Cin)   padded NHWC input slice, bf16
    w_ref:     (KH*KW*Cin, Cout)  im2col-ordered weights, bf16
    b_ref:     (1, Cout)          bias, f32
    y_ref:     (1, Cout, OH*OW)   conv output (pre-BN), channel-major, bf16
    stats_ref: (1, 2, Cout)       per-batch [sum; sum of squares], f32
    """
    Cin = xp_ref.shape[3]

    # im2col: gather the KH*KW taps once (bf16), then ONE MXU matmul with
    # contraction depth KH*KW*Cin instead of KH*KW tiny K=Cin matmuls.
    cols = []
    for kh in range(KH):                         # static unroll over kernel taps
        for kw in range(KW):
            patch = xp_ref[0, kh:kh + OH, kw:kw + OW, :]       # (OH, OW, Cin)
            cols.append(patch.reshape(OH * OW, Cin))
    xcol = jnp.concatenate(cols, axis=1)                       # (OH*OW, KH*KW*Cin)

    acc = jnp.dot(xcol, w_ref[...], preferred_element_type=jnp.float32)
    acc = acc + b_ref[...]                                     # (OH*OW, Cout) f32

    # Per-batch partial statistics straight from the f32 accumulator.
    # (E[y^2]-E[y]^2 form; clamped in the wrapper.  A centered second pass
    # would be more robust if tolerances tighten.)
    stats_ref[0, 0:1, :] = jnp.sum(acc, axis=0, keepdims=True)
    stats_ref[0, 1:2, :] = jnp.sum(acc * acc, axis=0, keepdims=True)

    # Channel-major store: OH*OW on lanes (lane-dense) and already NCHW-shaped,
    # so the wrapper needs no output transpose.  bf16 halves HBM traffic for y.
    y_ref[0] = acc.T.astype(y_ref.dtype)


def _bn_apply_kernel(y_ref, scale_ref, shift_ref, o_ref):
    """o = y * scale[c] + shift[c]   (per-channel affine from batch statistics)."""
    y = y_ref[0].astype(jnp.float32)                           # (Cout, tile)
    o_ref[0] = (y * scale_ref[...] + shift_ref[...]).astype(o_ref.dtype)


def _pick_ohw_tile(ohw, cout, budget_bytes=2 * 1024 * 1024):
    """Largest lane-aligned spatial tile that keeps bn-apply blocks ~budget_bytes."""
    target = max(128, budget_bytes // (4 * max(cout, 1)))
    if ohw <= target or ohw % 128 != 0:
        return ohw
    t = min(ohw, (target // 128) * 128)
    while t >= 128:
        if ohw % t == 0:
            return t
        t -= 128
    return ohw


def bnconv2d_forward(x, w, b, gamma, beta, *, padding=1, eps=1e-5):
    """BNConv2d.forward: y = conv2d(x, w, b); return training-mode batchnorm(y)."""
    B, Cin, H, W = x.shape
    Cout, Cin_w, KH, KW = w.shape
    assert Cin == Cin_w
    # TODO(synk): general stride / dilation / groups (module forwards *args to
    # nn.Conv2d); this kernel covers the dense stride-1 case.
    OH = H + 2 * padding - KH + 1
    OW = W + 2 * padding - KW + 1
    OHW = OH * OW
    Hp, Wp = H + 2 * padding, W + 2 * padding
    K = KH * KW * Cin

    # Layout plumbing (tiny vs conv cost): NCHW -> padded NHWC bf16 input,
    # OIHW -> im2col-ordered (KH*KW*Cin, Cout) bf16 weights.
    xp = jnp.pad(jnp.transpose(x, (0, 2, 3, 1)),
                 ((0, 0), (padding, padding), (padding, padding), (0, 0))
                 ).astype(jnp.bfloat16)
    w_col = jnp.transpose(w, (2, 3, 1, 0)).reshape(K, Cout).astype(jnp.bfloat16)
    b2 = b.reshape(1, Cout).astype(jnp.float32)

    # TODO(synk): spatial (halo) tiling of this pass for very large images so
    # per-batch blocks stay under v7x's 64 MiB VMEM; whole-image blocks are
    # fine at these sizes.
    kernel_a = functools.partial(_conv_stats_kernel, OH=OH, OW=OW, KH=KH, KW=KW)
    y, stats = pl.pallas_call(
        kernel_a,
        out_shape=(
            jax.ShapeDtypeStruct((B, Cout, OHW), jnp.bfloat16),
            jax.ShapeDtypeStruct((B, 2, Cout), jnp.float32),
        ),
        grid=(B,),
        in_specs=[
            pl.BlockSpec((1, Hp, Wp, Cin), lambda i: (i, 0, 0, 0)),
            pl.BlockSpec((K, Cout), lambda i: (0, 0)),
            pl.BlockSpec((1, Cout), lambda i: (0, 0)),
        ],
        out_specs=(
            pl.BlockSpec((1, Cout, OHW), lambda i: (i, 0, 0)),
            pl.BlockSpec((1, 2, Cout), lambda i: (i, 0, 0)),   # per-batch partials
        ),
        compiler_params=pltpu.CompilerParams(
            dimension_semantics=("parallel",),                 # no reduction carry
            vmem_limit_bytes=_VMEM_LIMIT),
    )(xp, w_col, b2)

    # Tiny (Cout,)-sized glue: partial sums -> biased batch variance -> affine.
    s = jnp.sum(stats, axis=0)                                 # (2, Cout)
    count = float(B * OHW)
    mean = s[0] / count
    var = jnp.maximum(s[1] / count - mean * mean, 0.0)
    scale = gamma.astype(jnp.float32) * jax.lax.rsqrt(var + eps)
    shift = beta.astype(jnp.float32) - mean * scale

    tile = _pick_ohw_tile(OHW, Cout)
    nt = OHW // tile
    out = pl.pallas_call(
        _bn_apply_kernel,
        out_shape=jax.ShapeDtypeStruct((B, Cout, OHW), jnp.float32),
        grid=(B, nt),
        in_specs=[
            pl.BlockSpec((1, Cout, tile), lambda i, j: (i, 0, j)),
            pl.BlockSpec((Cout, 1), lambda i, j: (0, 0)),
            pl.BlockSpec((Cout, 1), lambda i, j: (0, 0)),
        ],
        out_specs=pl.BlockSpec((1, Cout, tile), lambda i, j: (i, 0, j)),
        compiler_params=pltpu.CompilerParams(
            dimension_semantics=("parallel", "parallel"),
            vmem_limit_bytes=_VMEM_LIMIT),
    )(y, scale.reshape(Cout, 1), shift.reshape(Cout, 1))

    # Already channel-major: just fold the spatial axis back out (no transpose).
    return out.reshape(B, Cout, OH, OW)


def _bnconv2d_ref(x, w, b, gamma, beta, *, padding=1, eps=1e-5):
    """Pure-JAX reference mirroring the PyTorch training-mode forward."""
    y = jax.lax.conv_general_dilated(
        x, w, window_strides=(1, 1),
        padding=((padding, padding), (padding, padding)),
        dimension_numbers=("NCHW", "OIHW", "NCHW"),
        precision=jax.lax.Precision.HIGHEST)
    y = y + b[None, :, None, None]
    mean = y.mean(axis=(0, 2, 3))
    var = ((y - mean[None, :, None, None]) ** 2).mean(axis=(0, 2, 3))  # biased
    yhat = (y - mean[None, :, None, None]) * jax.lax.rsqrt(
        var + eps)[None, :, None, None]
    return yhat * gamma[None, :, None, None] + beta[None, :, None, None]


if __name__ == "__main__":
    key = jax.random.PRNGKey(0)
    kx, kw_, kb, kg, kbe = jax.random.split(key, 5)

    B, Cin, H, W = 2, 4, 16, 16
    Cout, KH, KW, padding = 8, 3, 3, 1

    x = jax.random.normal(kx, (B, Cin, H, W), dtype=jnp.float32)
    w = jax.random.normal(kw_, (Cout, Cin, KH, KW),
                          dtype=jnp.float32) / (Cin * KH * KW) ** 0.5
    b = 0.1 * jax.random.normal(kb, (Cout,), dtype=jnp.float32)
    gamma = 1.0 + 0.1 * jax.random.normal(kg, (Cout,), dtype=jnp.float32)
    beta = 0.1 * jax.random.normal(kbe, (Cout,), dtype=jnp.float32)

    out = jax.block_until_ready(
        bnconv2d_forward(x, w, b, gamma, beta, padding=padding))
    assert out.shape == (B, Cout, H, W), out.shape

    # The reference mirrors the kernel's MXU input precision (bf16 operands,
    # f32 accumulation); the remaining tolerance covers the bf16 storage of
    # the conv intermediate y (BN output is ~unit scale, so ~1e-2 worst case).
    xb = x.astype(jnp.bfloat16).astype(jnp.float32)
    wb = w.astype(jnp.bfloat16).astype(jnp.float32)
    ref = _bnconv2d_ref(xb, wb, b, gamma, beta, padding=padding)
    err = float(jnp.max(jnp.abs(out - ref)))
    assert jnp.allclose(out, ref, atol=3e-2, rtol=3e-2), f"max abs err {err}"

    print("KERNEL_OK")
</pallas_src>

<mosaic_0001>
module attributes {stable_mosaic.version = 11 : i64} {
  func.func @_conv_stats_kernel(%arg0: i32, %arg1: memref<1x18x18x4xbf16, #tpu.memory_space<vmem>>, %arg2: memref<36x8xbf16, #tpu.memory_space<vmem>>, %arg3: memref<1x8xf32, #tpu.memory_space<vmem>>, %arg4: memref<1x8x256xbf16, #tpu.memory_space<vmem>>, %arg5: memref<1x2x8xf32, #tpu.memory_space<vmem>>) attributes {dimension_semantics = [#tpu.dimension_semantics<parallel>], iteration_bounds = array<i64: 2>, scalar_prefetch = 0 : i64, scratch_operands = 0 : i64, tpu.core_type = #tpu.core_type<tc>, window_params = [{transform_indices = @transform_0, window_bounds = array<i64: 1, 18, 18, 4>}, {pipeline_mode = #tpu.pipeline_mode<synchronous>, transform_indices = @transform_1, window_bounds = array<i64: 36, 8>}, {pipeline_mode = #tpu.pipeline_mode<synchronous>, transform_indices = @transform_2, window_bounds = array<i64: 1, 8>}, {transform_indices = @transform_3, window_bounds = array<i64: 1, 8, 256>}, {transform_indices = @transform_4, window_bounds = array<i64: 1, 2, 8>}]} {
    %c0 = arith.constant 0 : index
    %c0_0 = arith.constant 0 : index
    %c0_1 = arith.constant 0 : index
    %c0_2 = arith.constant 0 : index
    %0 = vector.load %arg1[%c0, %c0_0, %c0_1, %c0_2] : memref<1x18x18x4xbf16, #tpu.memory_space<vmem>>, vector<1x16x16x4xbf16>
    %1 = vector.shape_cast %0 : vector<1x16x16x4xbf16> to vector<16x16x4xbf16>
    %2 = vector.shape_cast %1 : vector<16x16x4xbf16> to vector<256x4xbf16>
    %c0_3 = arith.constant 0 : index
    %c0_4 = arith.constant 0 : index
    %c1 = arith.constant 1 : index
    %c0_5 = arith.constant 0 : index
    %3 = vector.load %arg1[%c0_3, %c0_4, %c1, %c0_5] : memref<1x18x18x4xbf16, #tpu.memory_space<vmem>>, vector<1x16x16x4xbf16>
    %4 = vector.shape_cast %3 : vector<1x16x16x4xbf16> to vector<16x16x4xbf16>
    %5 = vector.shape_cast %4 : vector<16x16x4xbf16> to vector<256x4xbf16>
    %c0_6 = arith.constant 0 : index
    %c0_7 = arith.constant 0 : index
    %c2 = arith.constant 2 : index
    %c0_8 = arith.constant 0 : index
    %6 = vector.load %arg1[%c0_6, %c0_7, %c2, %c0_8] : memref<1x18x18x4xbf16, #tpu.memory_space<vmem>>, vector<1x16x16x4xbf16>
    %7 = vector.shape_cast %6 : vector<1x16x16x4xbf16> to vector<16x16x4xbf16>
    %8 = vector.shape_cast %7 : vector<16x16x4xbf16> to vector<256x4xbf16>
    %c0_9 = arith.constant 0 : index
    %c1_10 = arith.constant 1 : index
    %c0_11 = arith.constant 0 : index
    %c0_12 = arith.constant 0 : index
    %9 = vector.load %arg1[%c0_9, %c1_10, %c0_11, %c0_12] : memref<1x18x18x4xbf16, #tpu.memory_space<vmem>>, vector<1x16x16x4xbf16>
    %10 = vector.shape_cast %9 : vector<1x16x16x4xbf16> to vector<16x16x4xbf16>
    %11 = vector.shape_cast %10 : vector<16x16x4xbf16> to vector<256x4xbf16>
    %c0_13 = arith.constant 0 : index
    %c1_14 = arith.constant 1 : index
    %c1_15 = arith.constant 1 : index
    %c0_16 = arith.constant 0 : index
    %12 = vector.load %arg1[%c0_13, %c1_14, %c1_15, %c0_16] : memref<1x18x18x4xbf16, #tpu.memory_space<vmem>>, vector<1x16x16x4xbf16>
    %13 = vector.shape_cast %12 : vector<1x16x16x4xbf16> to vector<16x16x4xbf16>
    %14 = vector.shape_cast %13 : vector<16x16x4xbf16> to vector<256x4xbf16>
    %c0_17 = arith.constant 0 : index
    %c1_18 = arith.constant 1 : index
    %c2_19 = arith.constant 2 : index
    %c0_20 = arith.constant 0 : index
    %15 = vector.load %arg1[%c0_17, %c1_18, %c2_19, %c0_20] : memref<1x18x18x4xbf16, #tpu.memory_space<vmem>>, vector<1x16x16x4xbf16>
    %16 = vector.shape_cast %15 : vector<1x16x16x4xbf16> to vector<16x16x4xbf16>
    %17 = vector.shape_cast %16 : vector<16x16x4xbf16> to vector<256x4xbf16>
    %c0_21 = arith.constant 0 : index
    %c2_22 = arith.constant 2 : index
    %c0_23 = arith.constant 0 : index
    %c0_24 = arith.constant 0 : index
    %18 = vector.load %arg1[%c0_21, %c2_22, %c0_23, %c0_24] : memref<1x18x18x4xbf16, #tpu.memory_space<vmem>>, vector<1x16x16x4xbf16>
    %19 = vector.shape_cast %18 : vector<1x16x16x4xbf16> to vector<16x16x4xbf16>
    %20 = vector.shape_cast %19 : vector<16x16x4xbf16> to vector<256x4xbf16>
    %c0_25 = arith.constant 0 : index
    %c2_26 = arith.constant 2 : index
    %c1_27 = arith.constant 1 : index
    %c0_28 = arith.constant 0 : index
    %21 = vector.load %arg1[%c0_25, %c2_26, %c1_27, %c0_28] : memref<1x18x18x4xbf16, #tpu.memory_space<vmem>>, vector<1x16x16x4xbf16>
    %22 = vector.shape_cast %21 : vector<1x16x16x4xbf16> to vector<16x16x4xbf16>
    %23 = vector.shape_cast %22 : vector<16x16x4xbf16> to vector<256x4xbf16>
    %c0_29 = arith.constant 0 : index
    %c2_30 = arith.constant 2 : index
    %c2_31 = arith.constant 2 : index
    %c0_32 = arith.constant 0 : index
    %24 = vector.load %arg1[%c0_29, %c2_30, %c2_31, %c0_32] : memref<1x18x18x4xbf16, #tpu.memory_space<vmem>>, vector<1x16x16x4xbf16>
    %25 = vector.shape_cast %24 : vector<1x16x16x4xbf16> to vector<16x16x4xbf16>
    %26 = vector.shape_cast %25 : vector<16x16x4xbf16> to vector<256x4xbf16>
    %27 = tpu.concatenate %2, %5, %8, %11, %14, %17, %20, %23, %26 in 1 : vector<256x4xbf16>, vector<256x4xbf16>, vector<256x4xbf16>, vector<256x4xbf16>, vector<256x4xbf16>, vector<256x4xbf16>, vector<256x4xbf16>, vector<256x4xbf16>, vector<256x4xbf16> -> vector<256x36xbf16>
    %c0_33 = arith.constant 0 : index
    %c0_34 = arith.constant 0 : index
    %28 = vector.load %arg2[%c0_33, %c0_34] : memref<36x8xbf16, #tpu.memory_space<vmem>>, vector<36x8xbf16>
    %cst = arith.constant dense<0.000000e+00> : vector<256x8xf32>
    %29 = tpu.matmul %27, %28, %cst {dimension_numbers = #tpu.dot_dimension_numbers<[1], [0], [0], [1], [0, 0, 1, 1], [], []>} : vector<256x36xbf16>, vector<36x8xbf16>, vector<256x8xf32> -> vector<256x8xf32>
    %c0_35 = arith.constant 0 : index
    %c0_36 = arith.constant 0 : index
    %30 = vector.load %arg3[%c0_35, %c0_36] : memref<1x8xf32, #tpu.memory_space<vmem>>, vector<1x8xf32>
    %31 = vector.broadcast %30 : vector<1x8xf32> to vector<256x8xf32>
    %32 = arith.addf %29, %31 : vector<256x8xf32>
    %cst_37 = arith.constant dense<0.000000e+00> : vector<8xf32>
    %33 = vector.multi_reduction <add>, %32, %cst_37 [0] : vector<256x8xf32> to vector<8xf32>
    %34 = vector.shape_cast %33 : vector<8xf32> to vector<1x8xf32>
    %c0_38 = arith.constant 0 : index
    %c0_39 = arith.constant 0 : index
    %c0_40 = arith.constant 0 : index
    %35 = vector.load %arg5[%c0_38, %c0_39, %c0_40] : memref<1x2x8xf32, #tpu.memory_space<vmem>>, vector<1x1x8xf32>
    %36 = vector.shape_cast %35 : vector<1x1x8xf32> to vector<1x8xf32>
    %37 = vector.shape_cast %34 : vector<1x8xf32> to vector<1x1x8xf32>
    tpu.vector_store %arg5[%c0_38, %c0_39, %c0_40], %37 {strides = array<i32>} : memref<1x2x8xf32, #tpu.memory_space<vmem>>, vector<1x1x8xf32>,
    %38 = arith.mulf %32, %32 : vector<256x8xf32>
    %cst_41 = arith.constant dense<0.000000e+00> : vector<8xf32>
    %39 = vector.multi_reduction <add>, %38, %cst_41 [0] : vector<256x8xf32> to vector<8xf32>
    %40 = vector.shape_cast %39 : vector<8xf32> to vector<1x8xf32>
    %c0_42 = arith.constant 0 : index
    %c1_43 = arith.constant 1 : index
    %c0_44 = arith.constant 0 : index
    %41 = vector.load %arg5[%c0_42, %c1_43, %c0_44] : memref<1x2x8xf32, #tpu.memory_space<vmem>>, vector<1x1x8xf32>
    %42 = vector.shape_cast %41 : vector<1x1x8xf32> to vector<1x8xf32>
    %43 = vector.shape_cast %40 : vector<1x8xf32> to vector<1x1x8xf32>
    tpu.vector_store %arg5[%c0_42, %c1_43, %c0_44], %43 {strides = array<i32>} : memref<1x2x8xf32, #tpu.memory_space<vmem>>, vector<1x1x8xf32>,
    %44 = tpu.transpose %32, [1, 0] : vector<256x8xf32> -> vector<8x256xf32>
    %45 = arith.truncf %44 : vector<8x256xf32> to vector<8x256xbf16>
    %c0_45 = arith.constant 0 : index
    %c0_46 = arith.constant 0 : index
    %c0_47 = arith.constant 0 : index
    %46 = vector.load %arg4[%c0_45, %c0_46, %c0_47] : memref<1x8x256xbf16, #tpu.memory_space<vmem>>, vector<1x8x256xbf16>
    %47 = vector.shape_cast %46 : vector<1x8x256xbf16> to vector<8x256xbf16>
    %48 = vector.shape_cast %45 : vector<8x256xbf16> to vector<1x8x256xbf16>
    tpu.vector_store %arg4[%c0_45, %c0_46, %c0_47], %48 {strides = array<i32>} : memref<1x8x256xbf16, #tpu.memory_space<vmem>>, vector<1x8x256xbf16>,
    return
  }
  func.func @transform_0(%arg0: i32) -> (i32, i32, i32, i32) {
    %c0_i32 = arith.constant 0 : i32
    %c0_i32_0 = arith.constant 0 : i32
    %c0_i32_1 = arith.constant 0 : i32
    %c0_i32_2 = arith.constant 0 : i32
    return %arg0, %c0_i32, %c0_i32_0, %c0_i32_1 : i32, i32, i32, i32
  }
  func.func @transform_1(%arg0: i32) -> (i32, i32) {
    %c0_i32 = arith.constant 0 : i32
    %c0_i32_0 = arith.constant 0 : i32
    %c0_i32_1 = arith.constant 0 : i32
    return %c0_i32, %c0_i32_0 : i32, i32
  }
  func.func @transform_2(%arg0: i32) -> (i32, i32) {
    %c0_i32 = arith.constant 0 : i32
    %c0_i32_0 = arith.constant 0 : i32
    %c0_i32_1 = arith.constant 0 : i32
    return %c0_i32, %c0_i32_0 : i32, i32
  }
  func.func @transform_3(%arg0: i32) -> (i32, i32, i32) {
    %c0_i32 = arith.constant 0 : i32
    %c0_i32_0 = arith.constant 0 : i32
    %c0_i32_1 = arith.constant 0 : i32
    return %arg0, %c0_i32, %c0_i32_0 : i32, i32, i32
  }
  func.func @transform_4(%arg0: i32) -> (i32, i32, i32) {
    %c0_i32 = arith.constant 0 : i32
    %c0_i32_0 = arith.constant 0 : i32
    %c0_i32_1 = arith.constant 0 : i32
    return %arg0, %c0_i32, %c0_i32_0 : i32, i32, i32
  }
}

</mosaic_0001>

<llo_original>
// kernel: tpu_custom_call.1
$region0: #{tpu_custom_call.1}
  #allocation0 [shape = 'u32[]', space=smem, size = 0x4, offset = 0x4, fixed_abs, tag = 'smem constant byte address 0x4 - core index']
  #allocation1 [shape = 'u32[144,128]{1,0:T(1,128)}', space=vmem, size = 0x12000, scoped, tag = 'internal scratch']
  %s0 = inlined_call_operand.vmem [shape: bf16[2,18,18,4], index: 0, kind: input, shape index: {}]
  %s1 = inlined_call_operand.vmem [shape: bf16[36,8], index: 1, kind: input, shape index: {}]
  %s2 = inlined_call_operand.vmem [shape: f32[1,8], index: 2, kind: input, shape index: {}]
  %s3 = inlined_call_operand.hbm [shape: bf16[2,8,256], index: 3, kind: output, shape index: {0}]
  %s4 = inlined_call_operand.hbm [shape: f32[2,2,8], index: 4, kind: output, shape index: {1}]
  %5 = xla_tuple %s3, %s4
  %s6 = sld [smem:[#allocation0]]
  $region53: #{tpu_custom_call.1} parent=0
    _
  %s8 = ssub.s32 1, %s6
  %s9 = scalar_select 0, %s8, %s6
  $region1: #{tpu_custom_call.1} parent=0
    #allocation2 [shape = 'u8[8192]{0}', space=vmem, size = 0x2000, scoped, tag = 'output window, operand 0']
    #allocation3 [shape = 's32[2]{0}', space=sflag, size = 0x8, scoped, tag = 'scoped memory for tpu_custom_call.1']
    #allocation4 [shape = 'u8[2048]{0}', space=vmem, size = 0x800, scoped, tag = 'output window, operand 1']
    #allocation5 [shape = 's32[2]{0}', space=sflag, size = 0x8, scoped, tag = 'scoped memory for tpu_custom_call.1']
    %10 = vsyncpa [#allocation3], 0
    %s11 = scalar_lea.sflag [#allocation3], 1
    %12 = vsyncpa %s11, 0
    %13 = vsyncpa [#allocation5], 0
    %s14 = scalar_lea.sflag [#allocation5], 1
    %15 = vsyncpa %s14, 0
    loop: start=0, step=1, limit=4
    $region2: #{tpu_custom_call.1} parent=1 // loop_pre_header
      _
    $region3: #{tpu_custom_call.1} parent=1 // loop_header
      %s17 = sphi 0, %s21
      %p18 = scmp.ge.s32.totalorder %s17, 4
      %s27 = sphi 0, %s29
      %s30 = sphi 0, %s27
      %s31 = sphi 0, %s30
      %s47 = sphi 0, %s31
      %s51 = sphi 0, %s51
      %s53 = sphi 0, %s51
      %s54 = sphi 0, %s53
      %s68 = sphi 0, %s54
      %s72 = sphi 0, %s72
      %s74 = sphi 0, %s72
      %s75 = sphi 0, %s74
      %s89 = sphi 0, %s75
      %s95 = sphi 0, %s97
      %s98 = sphi 0, %s95
      %s99 = sphi 0, %s98
      %s115 = sphi 0, %s99
      %s121 = sphi 0, %s123
      %s124 = sphi 0, %s121
      %s125 = sphi 0, %s124
      %s141 = sphi 0, %s125
    $region4: #{tpu_custom_call.1} parent=1 // loop_header_branch
      %20 = sbr.rel (%p18) target = $region8
    $region5: #{tpu_custom_call.1} parent=1 // loop_body
      %s22 = ssub.s32 %s17, 1
      %s23 = ssub.s32 %s17, 2
      %s24 = sadd.s32 %s17, 1
      %s25 = ssub.s32 %s17, %s24
      %p26 = scmp.eq.s32.totalorder %s25, 0
      %s28 = sadd.s32 %s27, 1
      %s29 = scalar_select %p26, %s27, %s28
      %p32 = pneg %p26
      %p33 = scmp.eq.s32.totalorder %s17, 1
      %p34 = por %p32, %p33
      %p35 = scmp.ne.s32.totalorder %s27, %s30
      %p36 = scmp.eq.s32.totalorder %s17, 0
      %p37 = por %p35, %p36
      %p38 = scmp.ne.s32.totalorder %s27, %s30
      %p39 = scmp.eq.s32.totalorder %s22, 1
      %p40 = por %p38, %p39
      %p41 = scmp.ne.s32.totalorder %s30, %s31
      %p42 = scmp.eq.s32.totalorder %s22, 0
      %p43 = por %p41, %p42
      %p44 = scmp.ne.s32.totalorder %s30, %s31
      %p45 = scmp.eq.s32.totalorder %s23, 1
      %p46 = por %p44, %p45
      %p48 = scmp.ne.s32.totalorder %s31, %s47
      %p49 = scmp.eq.s32.totalorder %s23, 0
      %p50 = por %p48, %p49
      %s52 = sadd.s32 %s51, 1
      %p55 = scmp.eq.s32.totalorder %s17, 1
      %p56 = scmp.ne.s32.totalorder %s51, %s53
      %p57 = scmp.eq.s32.totalorder %s17, 0
      %p58 = por %p56, %p57
      %p59 = scmp.ne.s32.totalorder %s51, %s53
      %p60 = scmp.eq.s32.totalorder %s22, 1
      %p61 = por %p59, %p60
      %p62 = scmp.ne.s32.totalorder %s53, %s54
      %p63 = scmp.eq.s32.totalorder %s22, 0
      %p64 = por %p62, %p63
      %p65 = scmp.ne.s32.totalorder %s53, %s54
      %p66 = scmp.eq.s32.totalorder %s23, 1
      %p67 = por %p65, %p66
      %p69 = scmp.ne.s32.totalorder %s54, %s68
      %p70 = scmp.eq.s32.totalorder %s23, 0
      %p71 = por %p69, %p70
      %s73 = sadd.s32 %s72, 1
      %p76 = scmp.eq.s32.totalorder %s17, 1
      %p77 = scmp.ne.s32.totalorder %s72, %s74
      %p78 = scmp.eq.s32.totalorder %s17, 0
      %p79 = por %p77, %p78
      %p80 = scmp.ne.s32.totalorder %s72, %s74
      %p81 = scmp.eq.s32.totalorder %s22, 1
      %p82 = por %p80, %p81
      %p83 = scmp.ne.s32.totalorder %s74, %s75
      %p84 = scmp.eq.s32.totalorder %s22, 0
      %p85 = por %p83, %p84
      %p86 = scmp.ne.s32.totalorder %s74, %s75
      %p87 = scmp.eq.s32.totalorder %s23, 1
      %p88 = por %p86, %p87
      %p90 = scmp.ne.s32.totalorder %s75, %s89
      %p91 = scmp.eq.s32.totalorder %s23, 0
      %p92 = por %p90, %p91
      %s93 = ssub.s32 %s17, %s24
      %p94 = scmp.eq.s32.totalorder %s93, 0
      %s96 = sadd.s32 %s95, 1
      %s97 = scalar_select %p94, %s95, %s96
      %p100 = pneg %p94
      %p101 = scmp.eq.s32.totalorder %s17, 1
      %p102 = por %p100, %p101
      %p103 = scmp.ne.s32.totalorder %s95, %s98
      %p104 = scmp.eq.s32.totalorder %s17, 0
      %p105 = por %p103, %p104
      %p106 = scmp.ne.s32.totalorder %s95, %s98
      %p107 = scmp.eq.s32.totalorder %s22, 1
      %p108 = por %p106, %p107
      %p109 = scmp.ne.s32.totalorder %s98, %s99
      %p110 = scmp.eq.s32.totalorder %s22, 0
      %p111 = por %p109, %p110
      %p112 = scmp.ne.s32.totalorder %s98, %s99
      %p113 = scmp.eq.s32.totalorder %s23, 1
      %p114 = por %p112, %p113
      %p116 = scmp.ne.s32.totalorder %s99, %s115
      %p117 = scmp.eq.s32.totalorder %s23, 0
      %p118 = por %p116, %p117
      %s119 = ssub.s32 %s17, %s24
      %p120 = scmp.eq.s32.totalorder %s119, 0
      %s122 = sadd.s32 %s121, 1
      %s123 = scalar_select %p120, %s121, %s122
      %p126 = pneg %p120
      %p127 = scmp.eq.s32.totalorder %s17, 1
      %p128 = por %p126, %p127
      %p129 = scmp.ne.s32.totalorder %s121, %s124
      %p130 = scmp.eq.s32.totalorder %s17, 0
      %p131 = por %p129, %p130
      %p132 = scmp.ne.s32.totalorder %s121, %s124
      %p133 = scmp.eq.s32.totalorder %s22, 1
      %p134 = por %p132, %p133
      %p135 = scmp.ne.s32.totalorder %s124, %s125
      %p136 = scmp.eq.s32.totalorder %s22, 0
      %p137 = por %p135, %p136
      %p138 = scmp.ne.s32.totalorder %s124, %s125
      %p139 = scmp.eq.s32.totalorder %s23, 1
      %p140 = por %p138, %p139
      %p142 = scmp.ne.s32.totalorder %s125, %s141
      %p143 = scmp.eq.s32.totalorder %s23, 0
      %p144 = por %p142, %p143
      %p145 = scmp.le.s32.totalorder 1, %s17
      %p146 = scmp.lt.s32.totalorder %s17, 3
      %p147 = pnand %p145, %p146
      %p148 = pneg %p147
      // Predicated region
      $region9: #{tpu_custom_call.1} parent=5 // pred_check
        _
      $region10: #{tpu_custom_call.1} parent=5 // pred_check_branch
        %150 = sbr.rel (%p147) target = $region12
      $region11: #{tpu_custom_call.1} parent=5 // pred_region
        %s151 = ssub.s32 %s17, 1
        // Predicated region
        $region13: #{tpu_custom_call.1} parent=11 // pred_check
          %p152 = pneg %p64
        $region14: #{tpu_custom_call.1} parent=11 // pred_check_branch
          %154 = sbr.rel (%p152) target = $region16
        $region15: #{tpu_custom_call.1} parent=11 // pred_region
          _
        $region16: #{tpu_custom_call.1} parent=11 // pred_fallthru
          _
        // Predicated region
        $region17: #{tpu_custom_call.1} parent=11 // pred_check
          %p155 = pneg %p85
        $region18: #{tpu_custom_call.1} parent=11 // pred_check_branch
          %157 = sbr.rel (%p155) target = $region20
        $region19: #{tpu_custom_call.1} parent=11 // pred_region
          _
        $region20: #{tpu_custom_call.1} parent=11 // pred_fallthru
          _
      $region12: #{tpu_custom_call.1} parent=5 // pred_fallthru
        _
      %p158 = scmp.lt.s32.totalorder %s17, 2
      // Predicated region
      $region21: #{tpu_custom_call.1} parent=5 // pred_check
        %p159 = pneg %p158
      $region22: #{tpu_custom_call.1} parent=5 // pred_check_branch
        %161 = sbr.rel (%p159) target = $region24
      $region23: #{tpu_custom_call.1} parent=5 // pred_region
        // Predicated region
        $region25: #{tpu_custom_call.1} parent=23 // pred_check
          %p162 = pneg %p37
        $region26: #{tpu_custom_call.1} parent=23 // pred_check_branch
          %164 = sbr.rel (%p162) target = $region28
        $region27: #{tpu_custom_call.1} parent=23 // pred_region
          %p165 = scmp.lt.s32.totalorder %s17, 1
          %s166 = scalar_select %p165, %s17, 1
          %s167 = smul.addr %s166, 54
          %s168 = smul.addr %s167, 4
          %s169 = scalar_lea.vmem %s0, %s168
        $region28: #{tpu_custom_call.1} parent=23 // pred_fallthru
          _
      $region24: #{tpu_custom_call.1} parent=5 // pred_fallthru
        _
      %p170 = scmp.le.s32.totalorder 1, %s17
      %p171 = scmp.lt.s32.totalorder %s17, 3
      %p172 = pnand %p170, %p171
      %p173 = pneg %p172
      // Predicated region
      $region29: #{tpu_custom_call.1} parent=5 // pred_check
        _
      $region30: #{tpu_custom_call.1} parent=5 // pred_check_branch
        %175 = sbr.rel (%p172) target = $region32
      $region31: #{tpu_custom_call.1} parent=5 // pred_region
        %s176 = ssub.s32 %s17, 1
        %p177 = scmp.lt.s32.totalorder %s22, 1
        %s178 = scalar_select %p177, %s22, 1
        %s179 = smul.addr %s178, 54
        %s180 = smul.addr %s179, 4
        %s181 = scalar_lea.vmem %s0, %s180
        %p182 = pneg %p43
        %p183 = pneg %p40
        %p184 = pneg %p64
        %p185 = pneg %p61
        %p186 = pneg %p85
        %p187 = pneg %p82
        %p188 = pneg %p111
        %p189 = pneg %p108
        %s190 = sand.u32 %s98, 1
        %s191 = scalar_lea.sflag [#allocation3], %s190
        %s192 = sand.u32 %s98, 1
        %s193 = smul.addr %s192, 8
        %s194 = scalar_lea.vmem [#allocation2], %s193
        %p195 = pneg %p137
        %p196 = pneg %p134
        %s197 = sand.u32 %s124, 1
        %s198 = scalar_lea.sflag [#allocation5], %s197
        %s199 = sand.u32 %s124, 1
        %s200 = smul.addr %s199, 2
        %s201 = scalar_lea.vmem [#allocation4], %s200
        %p202 = scmp.lt.s32.totalorder %s22, 1
        %s203 = scalar_select %p202, %s22, 1
        %s204 = smul.addr %s203, 54
        %s205 = smul.addr %s204, 4
        %s206 = scalar_lea.vmem %s0, %s205
        %v208 = vld [vmem:[%s206] sm:$0xf]
        %v209 = vld [vmem:[%s206 + $0x4] sm:$0xf]
        %v210 = vld [vmem:[%s206 + $0xc] sm:$0xf]
        %v211 = vld [vmem:[%s206 + $0x10] sm:$0xf]
        %v212 = vld [vmem:[%s206 + $0x18] sm:$0xf]
        %v213 = vld [vmem:[%s206 + $0x1c] sm:$0xf]
        %v214 = vld [vmem:[%s206 + $0x24] sm:$0xf]
        %v215 = vld [vmem:[%s206 + $0x28] sm:$0xf]
        %v216 = vld [vmem:[%s206 + $0x30] sm:$0xf]
        %v217 = vld [vmem:[%s206 + $0x34] sm:$0xf]
        %v218 = vld [vmem:[%s206 + $0x3c] sm:$0xf]
        %v219 = vld [vmem:[%s206 + $0x40] sm:$0xf]
        %v220 = vld [vmem:[%s206 + $0x48] sm:$0xf]
        %v221 = vld [vmem:[%s206 + $0x4c] sm:$0xf]
        %v222 = vld [vmem:[%s206 + $0x54] sm:$0xf]
        %v223 = vld [vmem:[%s206 + $0x58] sm:$0xf]
        %v224 = vld [vmem:[%s206 + $0x60] sm:$0xf]
        %v225 = vld [vmem:[%s206 + $0x64] sm:$0xf]
        %v226 = vld [vmem:[%s206 + $0x6c] sm:$0xf]
        %v227 = vld [vmem:[%s206 + $0x70] sm:$0xf]
        %v228 = vld [vmem:[%s206 + $0x78] sm:$0xf]
        %v229 = vld [vmem:[%s206 + $0x7c] sm:$0xf]
        %v230 = vld [vmem:[%s206 + $0x84] sm:$0xf]
        %v231 = vld [vmem:[%s206 + $0x88] sm:$0xf]
        %v232 = vld [vmem:[%s206 + $0x90] sm:$0xf]
        %v233 = vld [vmem:[%s206 + $0x94] sm:$0xf]
        %v234 = vld [vmem:[%s206 + $0x9c] sm:$0xf]
        %v235 = vld [vmem:[%s206 + $0xa0] sm:$0xf]
        %v236 = vld [vmem:[%s206 + $0xa8] sm:$0xf]
        %v237 = vld [vmem:[%s206 + $0xac] sm:$0xf]
        %v238 = vld [vmem:[%s206 + $0xb4] sm:$0xf]
        %v239 = vld [vmem:[%s206 + $0xb8] sm:$0xf]
        %v240 = vld [vmem:[%s206 + $0x8] sm:$0x1]
        %v241 = vld [vmem:[%s206 + $0x14] sm:$0x1]
        %v242 = vld [vmem:[%s206 + $0x20] sm:$0x1]
        %v243 = vld [vmem:[%s206 + $0x2c] sm:$0x1]
        %v244 = vld [vmem:[%s206 + $0x38] sm:$0x1]
        %v245 = vld [vmem:[%s206 + $0x44] sm:$0x1]
        %v246 = vld [vmem:[%s206 + $0x50] sm:$0x1]
        %v247 = vld [vmem:[%s206 + $0x5c] sm:$0x1]
        %v248 = vld [vmem:[%s206 + $0x68] sm:$0x1]
        %v249 = vld [vmem:[%s206 + $0x74] sm:$0x1]
        %v250 = vld [vmem:[%s206 + $0x80] sm:$0x1]
        %v251 = vld [vmem:[%s206 + $0x8c] sm:$0x1]
        %v252 = vld [vmem:[%s206 + $0x98] sm:$0x1]
        %v253 = vld [vmem:[%s206 + $0xa4] sm:$0x1]
        %v254 = vld [vmem:[%s206 + $0xb0] sm:$0x1]
        %v255 = vld [vmem:[%s206 + $0xbc] sm:$0x1]
        %vm256 = vsmask.f32 3328
        %vm257 = vsmask.f32 7440
        %vm258 = vmor %vm256, %vm257
        %v260 = vshrl.u32 %v208, 16
        %v262 = vrot.slane %v260, 4
        %v263 = vshll.u32 %v208, 16
        %v265 = vrot.slane %v263, 5
        %v266 = vor.u32 %v262, %v265
        %v267 = vrot.slane %v266, 4
        %v269 = vshll.u32 %v209, 16
        %v271 = vrot.slane %v269, 5
        %v272 = vsel %vm258, %v267, %v271
        %v273 = vshrl.u32 %v209, 16
        %v275 = vrot.slane %v273, 4
        %v276 = vor.u32 %v275, %v271
        %v277 = vrot.slane %v276, 4
        %v279 = vshll.u32 %v240, 16
        %v281 = vrot.slane %v279, 5
        %v282 = vsel %vm258, %v277, %v281
        %v284 = vshrl.u32 %v210, 16
        %v286 = vrot.slane %v284, 4
        %v287 = vshll.u32 %v210, 16
        %v289 = vrot.slane %v287, 5
        %v290 = vor.u32 %v286, %v289
        %v291 = vrot.slane %v290, 4
        %v293 = vshll.u32 %v211, 16
        %v295 = vrot.slane %v293, 5
        %v296 = vsel %vm258, %v291, %v295
        %v297 = vshrl.u32 %v211, 16
        %v299 = vrot.slane %v297, 4
        %v300 = vor.u32 %v299, %v295
        %v301 = vrot.slane %v300, 4
        %v303 = vshll.u32 %v241, 16
        %v305 = vrot.slane %v303, 5
        %v306 = vsel %vm258, %v301, %v305
        %v308 = vshrl.u32 %v212, 16
        %v310 = vrot.slane %v308, 4
        %v311 = vshll.u32 %v212, 16
        %v313 = vrot.slane %v311, 5
        %v314 = vor.u32 %v310, %v313
        %v315 = vrot.slane %v314, 4
        %v317 = vshll.u32 %v213, 16
        %v319 = vrot.slane %v317, 5
        %v320 = vsel %vm258, %v315, %v319
        %v321 = vshrl.u32 %v213, 16
        %v323 = vrot.slane %v321, 4
        %v324 = vor.u32 %v323, %v319
        %v325 = vrot.slane %v324, 4
        %v327 = vshll.u32 %v242, 16
        %v329 = vrot.slane %v327, 5
        %v330 = vsel %vm258, %v325, %v329
        %v332 = vshrl.u32 %v214, 16
        %v334 = vrot.slane %v332, 4
        %v335 = vshll.u32 %v214, 16
        %v337 = vrot.slane %v335, 5
        %v338 = vor.u32 %v334, %v337
        %v339 = vrot.slane %v338, 4
        %v341 = vshll.u32 %v215, 16
        %v343 = vrot.slane %v341, 5
        %v344 = vsel %vm258, %v339, %v343
        %v345 = vshrl.u32 %v215, 16
        %v347 = vrot.slane %v345, 4
        %v348 = vor.u32 %v347, %v343
        %v349 = vrot.slane %v348, 4
        %v351 = vshll.u32 %v243, 16
        %v353 = vrot.slane %v351, 5
        %v354 = vsel %vm258, %v349, %v353
        %v356 = vshrl.u32 %v216, 16
        %v358 = vrot.slane %v356, 4
        %v359 = vshll.u32 %v216, 16
        %v361 = vrot.slane %v359, 5
        %v362 = vor.u32 %v358, %v361
        %v363 = vrot.slane %v362, 4
        %v365 = vshll.u32 %v217, 16
        %v367 = vrot.slane %v365, 5
        %v368 = vsel %vm258, %v363, %v367
        %v369 = vshrl.u32 %v217, 16
        %v371 = vrot.slane %v369, 4
        %v372 = vor.u32 %v371, %v367
        %v373 = vrot.slane %v372, 4
        %v375 = vshll.u32 %v244, 16
        %v377 = vrot.slane %v375, 5
        %v378 = vsel %vm258, %v373, %v377
        %v380 = vshrl.u32 %v218, 16
        %v382 = vrot.slane %v380, 4
        %v383 = vshll.u32 %v218, 16
        %v385 = vrot.slane %v383, 5
        %v386 = vor.u32 %v382, %v385
        %v387 = vrot.slane %v386, 4
        %v389 = vshll.u32 %v219, 16
        %v391 = vrot.slane %v389, 5
        %v392 = vsel %vm258, %v387, %v391
        %v393 = vshrl.u32 %v219, 16
        %v395 = vrot.slane %v393, 4
        %v396 = vor.u32 %v395, %v391
        %v397 = vrot.slane %v396, 4
        %v399 = vshll.u32 %v245, 16
        %v401 = vrot.slane %v399, 5
        %v402 = vsel %vm258, %v397, %v401
        %v404 = vshrl.u32 %v220, 16
        %v406 = vrot.slane %v404, 4
        %v407 = vshll.u32 %v220, 16
        %v409 = vrot.slane %v407, 5
        %v410 = vor.u32 %v406, %v409
        %v411 = vrot.slane %v410, 4
        %v413 = vshll.u32 %v221, 16
        %v415 = vrot.slane %v413, 5
        %v416 = vsel %vm258, %v411, %v415
        %v417 = vshrl.u32 %v221, 16
        %v419 = vrot.slane %v417, 4
        %v420 = vor.u32 %v419, %v415
        %v421 = vrot.slane %v420, 4
        %v423 = vshll.u32 %v246, 16
        %v425 = vrot.slane %v423, 5
        %v426 = vsel %vm258, %v421, %v425
        %v428 = vshrl.u32 %v222, 16
        %v430 = vrot.slane %v428, 4
        %v431 = vshll.u32 %v222, 16
        %v433 = vrot.slane %v431, 5
        %v434 = vor.u32 %v430, %v433
        %v435 = vrot.slane %v434, 4
        %v437 = vshll.u32 %v223, 16
        %v439 = vrot.slane %v437, 5
        %v440 = vsel %vm258, %v435, %v439
        %v441 = vshrl.u32 %v223, 16
        %v443 = vrot.slane %v441, 4
        %v444 = vor.u32 %v443, %v439
        %v445 = vrot.slane %v444, 4
        %v447 = vshll.u32 %v247, 16
        %v449 = vrot.slane %v447, 5
        %v450 = vsel %vm258, %v445, %v449
        %v452 = vshrl.u32 %v224, 16
        %v454 = vrot.slane %v452, 4
        %v455 = vshll.u32 %v224, 16
        %v457 = vrot.slane %v455, 5
        %v458 = vor.u32 %v454, %v457
        %v459 = vrot.slane %v458, 4
        %v461 = vshll.u32 %v225, 16
        %v463 = vrot.slane %v461, 5
        %v464 = vsel %vm258, %v459, %v463
        %v465 = vshrl.u32 %v225, 16
        %v467 = vrot.slane %v465, 4
        %v468 = vor.u32 %v467, %v463
        %v469 = vrot.slane %v468, 4
        %v471 = vshll.u32 %v248, 16
        %v473 = vrot.slane %v471, 5
        %v474 = vsel %vm258, %v469, %v473
        %v476 = vshrl.u32 %v226, 16
        %v478 = vrot.slane %v476, 4
        %v479 = vshll.u32 %v226, 16
        %v481 = vrot.slane %v479, 5
        %v482 = vor.u32 %v478, %v481
        %v483 = vrot.slane %v482, 4
        %v485 = vshll.u32 %v227, 16
        %v487 = vrot.slane %v485, 5
        %v488 = vsel %vm258, %v483, %v487
        %v489 = vshrl.u32 %v227, 16
        %v491 = vrot.slane %v489, 4
        %v492 = vor.u32 %v491, %v487
        %v493 = vrot.slane %v492, 4
        %v495 = vshll.u32 %v249, 16
        %v497 = vrot.slane %v495, 5
        %v498 = vsel %vm258, %v493, %v497
        %v500 = vshrl.u32 %v228, 16
        %v502 = vrot.slane %v500, 4
        %v503 = vshll.u32 %v228, 16
        %v505 = vrot.slane %v503, 5
        %v506 = vor.u32 %v502, %v505
        %v507 = vrot.slane %v506, 4
        %v509 = vshll.u32 %v229, 16
        %v511 = vrot.slane %v509, 5
        %v512 = vsel %vm258, %v507, %v511
        %v513 = vshrl.u32 %v229, 16
        %v515 = vrot.slane %v513, 4
        %v516 = vor.u32 %v515, %v511
        %v517 = vrot.slane %v516, 4
        %v519 = vshll.u32 %v250, 16
        %v521 = vrot.slane %v519, 5
        %v522 = vsel %vm258, %v517, %v521
        %v524 = vshrl.u32 %v230, 16
        %v526 = vrot.slane %v524, 4
        %v527 = vshll.u32 %v230, 16
        %v529 = vrot.slane %v527, 5
        %v530 = vor.u32 %v526, %v529
        %v531 = vrot.slane %v530, 4
        %v533 = vshll.u32 %v231, 16
        %v535 = vrot.slane %v533, 5
        %v536 = vsel %vm258, %v531, %v535
        %v537 = vshrl.u32 %v231, 16
        %v539 = vrot.slane %v537, 4
        %v540 = vor.u32 %v539, %v535
        %v541 = vrot.slane %v540, 4
        %v543 = vshll.u32 %v251, 16
        %v545 = vrot.slane %v543, 5
        %v546 = vsel %vm258, %v541, %v545
        %v548 = vshrl.u32 %v232, 16
        %v550 = vrot.slane %v548, 4
        %v551 = vshll.u32 %v232, 16
        %v553 = vrot.slane %v551, 5
        %v554 = vor.u32 %v550, %v553
        %v555 = vrot.slane %v554, 4
        %v557 = vshll.u32 %v233, 16
        %v559 = vrot.slane %v557, 5
        %v560 = vsel %vm258, %v555, %v559
        %v561 = vshrl.u32 %v233, 16
        %v563 = vrot.slane %v561, 4
        %v564 = vor.u32 %v563, %v559
        %v565 = vrot.slane %v564, 4
        %v567 = vshll.u32 %v252, 16
        %v569 = vrot.slane %v567, 5
        %v570 = vsel %vm258, %v565, %v569
        %v572 = vshrl.u32 %v234, 16
        %v574 = vrot.slane %v572, 4
        %v575 = vshll.u32 %v234, 16
        %v577 = vrot.slane %v575, 5
        %v578 = vor.u32 %v574, %v577
        %v579 = vrot.slane %v578, 4
        %v581 = vshll.u32 %v235, 16
        %v583 = vrot.slane %v581, 5
        %v584 = vsel %vm258, %v579, %v583
        %v585 = vshrl.u32 %v235, 16
        %v587 = vrot.slane %v585, 4
        %v588 = vor.u32 %v587, %v583
        %v589 = vrot.slane %v588, 4
        %v591 = vshll.u32 %v253, 16
        %v593 = vrot.slane %v591, 5
        %v594 = vsel %vm258, %v589, %v593
        %v596 = vshrl.u32 %v236, 16
        %v598 = vrot.slane %v596, 4
        %v599 = vshll.u32 %v236, 16
        %v601 = vrot.slane %v599, 5
        %v602 = vor.u32 %v598, %v601
        %v603 = vrot.slane %v602, 4
        %v605 = vshll.u32 %v237, 16
        %v607 = vrot.slane %v605, 5
        %v608 = vsel %vm258, %v603, %v607
        %v609 = vshrl.u32 %v237, 16
        %v611 = vrot.slane %v609, 4
        %v612 = vor.u32 %v611, %v607
        %v613 = vrot.slane %v612, 4
        %v615 = vshll.u32 %v254, 16
        %v617 = vrot.slane %v615, 5
        %v618 = vsel %vm258, %v613, %v617
        %v620 = vshrl.u32 %v238, 16
        %v622 = vrot.slane %v620, 4
        %v623 = vshll.u32 %v238, 16
        %v625 = vrot.slane %v623, 5
        %v626 = vor.u32 %v622, %v625
        %v627 = vrot.slane %v626, 4
        %v629 = vshll.u32 %v239, 16
        %v631 = vrot.slane %v629, 5
        %v632 = vsel %vm258, %v627, %v631
        %v633 = vshrl.u32 %v239, 16
        %v635 = vrot.slane %v633, 4
        %v636 = vor.u32 %v635, %v631
        %v637 = vrot.slane %v636, 4
        %v639 = vshll.u32 %v255, 16
        %v641 = vrot.slane %v639, 5
        %v642 = vsel %vm258, %v637, %v641
        %v643 = vld [vmem:[%s206] sm:$0xe]
        %v644 = vld [vmem:[%s206 + $0xc] sm:$0xe]
        %v645 = vld [vmem:[%s206 + $0x18] sm:$0xe]
        %v646 = vld [vmem:[%s206 + $0x24] sm:$0xe]
        %v647 = vld [vmem:[%s206 + $0x30] sm:$0xe]
        %v648 = vld [vmem:[%s206 + $0x3c] sm:$0xe]
        %v649 = vld [vmem:[%s206 + $0x48] sm:$0xe]
        %v650 = vld [vmem:[%s206 + $0x54] sm:$0xe]
        %v651 = vld [vmem:[%s206 + $0x60] sm:$0xe]
        %v652 = vld [vmem:[%s206 + $0x6c] sm:$0xe]
        %v653 = vld [vmem:[%s206 + $0x78] sm:$0xe]
        %v654 = vld [vmem:[%s206 + $0x84] sm:$0xe]
        %v655 = vld [vmem:[%s206 + $0x90] sm:$0xe]
        %v656 = vld [vmem:[%s206 + $0x9c] sm:$0xe]
        %v657 = vld [vmem:[%s206 + $0xa8] sm:$0xe]
        %v658 = vld [vmem:[%s206 + $0xb4] sm:$0xe]
        %vm707 = vcmask 1042432
        %vm708 = vcmask 1046532
        %vm709 = vmor %vm707, %vm708
        %v710 = vrot.slane %v643, 5
        %v711 = vrot.slane %v710, 4
        %v712 = vrot.slane %v209, 5
        %v713 = vsel %vm709, %v711, %v712
        %v714 = vrot.slane %v712, 4
        %v715 = vrot.slane %v240, 5
        %v716 = vsel %vm709, %v714, %v715
        %v717 = vrot.slane %v644, 5
        %v718 = vrot.slane %v717, 4
        %v719 = vrot.slane %v211, 5
        %v720 = vsel %vm709, %v718, %v719
        %v721 = vrot.slane %v719, 4
        %v722 = vrot.slane %v241, 5
        %v723 = vsel %vm709, %v721, %v722
        %v724 = vrot.slane %v645, 5
        %v725 = vrot.slane %v724, 4
        %v726 = vrot.slane %v213, 5
        %v727 = vsel %vm709, %v725, %v726
        %v728 = vrot.slane %v726, 4
        %v729 = vrot.slane %v242, 5
        %v730 = vsel %vm709, %v728, %v729
        %v731 = vrot.slane %v646, 5
        %v732 = vrot.slane %v731, 4
        %v733 = vrot.slane %v215, 5
        %v734 = vsel %vm709, %v732, %v733
        %v735 = vrot.slane %v733, 4
        %v736 = vrot.slane %v243, 5
        %v737 = vsel %vm709, %v735, %v736
        %v738 = vrot.slane %v647, 5
        %v739 = vrot.slane %v738, 4
        %v740 = vrot.slane %v217, 5
        %v741 = vsel %vm709, %v739, %v740
        %v742 = vrot.slane %v740, 4
        %v743 = vrot.slane %v244, 5
        %v744 = vsel %vm709, %v742, %v743
        %v745 = vrot.slane %v648, 5
        %v746 = vrot.slane %v745, 4
        %v747 = vrot.slane %v219, 5
        %v748 = vsel %vm709, %v746, %v747
        %v749 = vrot.slane %v747, 4
        %v750 = vrot.slane %v245, 5
        %v751 = vsel %vm709, %v749, %v750
        %v752 = vrot.slane %v649, 5
        %v753 = vrot.slane %v752, 4
        %v754 = vrot.slane %v221, 5
        %v755 = vsel %vm709, %v753, %v754
        %v756 = vrot.slane %v754, 4
        %v757 = vrot.slane %v246, 5
        %v758 = vsel %vm709, %v756, %v757
        %v759 = vrot.slane %v650, 5
        %v760 = vrot.slane %v759, 4
        %v761 = vrot.slane %v223, 5
        %v762 = vsel %vm709, %v760, %v761
        %v763 = vrot.slane %v761, 4
        %v764 = vrot.slane %v247, 5
        %v765 = vsel %vm709, %v763, %v764
        %v766 = vrot.slane %v651, 5
        %v767 = vrot.slane %v766, 4
        %v768 = vrot.slane %v225, 5
        %v769 = vsel %vm709, %v767, %v768
        %v770 = vrot.slane %v768, 4
        %v771 = vrot.slane %v248, 5
        %v772 = vsel %vm709, %v770, %v771
        %v773 = vrot.slane %v652, 5
        %v774 = vrot.slane %v773, 4
        %v775 = vrot.slane %v227, 5
        %v776 = vsel %vm709, %v774, %v775
        %v777 = vrot.slane %v775, 4
        %v778 = vrot.slane %v249, 5
        %v779 = vsel %vm709, %v777, %v778
        %v780 = vrot.slane %v653, 5
        %v781 = vrot.slane %v780, 4
        %v782 = vrot.slane %v229, 5
        %v783 = vsel %vm709, %v781, %v782
        %v784 = vrot.slane %v782, 4
        %v785 = vrot.slane %v250, 5
        %v786 = vsel %vm709, %v784, %v785
        %v787 = vrot.slane %v654, 5
        %v788 = vrot.slane %v787, 4
        %v789 = vrot.slane %v231, 5
        %v790 = vsel %vm709, %v788, %v789
        %v791 = vrot.slane %v789, 4
        %v792 = vrot.slane %v251, 5
        %v793 = vsel %vm709, %v791, %v792
        %v794 = vrot.slane %v655, 5
        %v795 = vrot.slane %v794, 4
        %v796 = vrot.slane %v233, 5
        %v797 = vsel %vm709, %v795, %v796
        %v798 = vrot.slane %v796, 4
        %v799 = vrot.slane %v252, 5
        %v800 = vsel %vm709, %v798, %v799
        %v801 = vrot.slane %v656, 5
        %v802 = vrot.slane %v801, 4
        %v803 = vrot.slane %v235, 5
        %v804 = vsel %vm709, %v802, %v803
        %v805 = vrot.slane %v803, 4
        %v806 = vrot.slane %v253, 5
        %v807 = vsel %vm709, %v805, %v806
        %v808 = vrot.slane %v657, 5
        %v809 = vrot.slane %v808, 4
        %v810 = vrot.slane %v237, 5
        %v811 = vsel %vm709, %v809, %v810
        %v812 = vrot.slane %v810, 4
        %v813 = vrot.slane %v254, 5
        %v814 = vsel %vm709, %v812, %v813
        %v815 = vrot.slane %v658, 5
        %v816 = vrot.slane %v815, 4
        %v817 = vrot.slane %v239, 5
        %v818 = vsel %vm709, %v816, %v817
        %v819 = vrot.slane %v817, 4
        %v820 = vrot.slane %v255, 5
        %v821 = vsel %vm709, %v819, %v820
        %s822 = scalar_lea.vmem %s206, 12
        %v823 = vld [vmem:[%s822] sm:$0xf]
        %v824 = vld [vmem:[%s822 + $0x4] sm:$0xf]
        %v825 = vld [vmem:[%s822 + $0xc] sm:$0xf]
        %v826 = vld [vmem:[%s822 + $0x10] sm:$0xf]
        %v827 = vld [vmem:[%s822 + $0x18] sm:$0xf]
        %v828 = vld [vmem:[%s822 + $0x1c] sm:$0xf]
        %v829 = vld [vmem:[%s822 + $0x24] sm:$0xf]
        %v830 = vld [vmem:[%s822 + $0x28] sm:$0xf]
        %v831 = vld [vmem:[%s822 + $0x30] sm:$0xf]
        %v832 = vld [vmem:[%s822 + $0x34] sm:$0xf]
        %v833 = vld [vmem:[%s822 + $0x3c] sm:$0xf]
        %v834 = vld [vmem:[%s822 + $0x40] sm:$0xf]
        %v835 = vld [vmem:[%s822 + $0x48] sm:$0xf]
        %v836 = vld [vmem:[%s822 + $0x4c] sm:$0xf]
        %v837 = vld [vmem:[%s822 + $0x54] sm:$0xf]
        %v838 = vld [vmem:[%s822 + $0x58] sm:$0xf]
        %v839 = vld [vmem:[%s822 + $0x60] sm:$0xf]
        %v840 = vld [vmem:[%s822 + $0x64] sm:$0xf]
        %v841 = vld [vmem:[%s822 + $0x6c] sm:$0xf]
        %v842 = vld [vmem:[%s822 + $0x70] sm:$0xf]
        %v843 = vld [vmem:[%s822 + $0x78] sm:$0xf]
        %v844 = vld [vmem:[%s822 + $0x7c] sm:$0xf]
        %v845 = vld [vmem:[%s822 + $0x84] sm:$0xf]
        %v846 = vld [vmem:[%s822 + $0x88] sm:$0xf]
        %v847 = vld [vmem:[%s822 + $0x90] sm:$0xf]
        %v848 = vld [vmem:[%s822 + $0x94] sm:$0xf]
        %v849 = vld [vmem:[%s822 + $0x9c] sm:$0xf]
        %v850 = vld [vmem:[%s822 + $0xa0] sm:$0xf]
        %v851 = vld [vmem:[%s822 + $0xa8] sm:$0xf]
        %v852 = vld [vmem:[%s822 + $0xac] sm:$0xf]
        %v853 = vld [vmem:[%s822 + $0xb4] sm:$0xf]
        %v854 = vld [vmem:[%s822 + $0xb8] sm:$0xf]
        %v855 = vld [vmem:[%s822 + $0x8] sm:$0x1]
        %v856 = vld [vmem:[%s822 + $0x14] sm:$0x1]
        %v857 = vld [vmem:[%s822 + $0x20] sm:$0x1]
        %v858 = vld [vmem:[%s822 + $0x2c] sm:$0x1]
        %v859 = vld [vmem:[%s822 + $0x38] sm:$0x1]
        %v860 = vld [vmem:[%s822 + $0x44] sm:$0x1]
        %v861 = vld [vmem:[%s822 + $0x50] sm:$0x1]
        %v862 = vld [vmem:[%s822 + $0x5c] sm:$0x1]
        %v863 = vld [vmem:[%s822 + $0x68] sm:$0x1]
        %v864 = vld [vmem:[%s822 + $0x74] sm:$0x1]
        %v865 = vld [vmem:[%s822 + $0x80] sm:$0x1]
        %v866 = vld [vmem:[%s822 + $0x8c] sm:$0x1]
        %v867 = vld [vmem:[%s822 + $0x98] sm:$0x1]
        %v868 = vld [vmem:[%s822 + $0xa4] sm:$0x1]
        %v869 = vld [vmem:[%s822 + $0xb0] sm:$0x1]
        %v870 = vld [vmem:[%s822 + $0xbc] sm:$0x1]
        %v872 = vshrl.u32 %v823, 16
        %v874 = vrot.slane %v872, 4
        %v875 = vshll.u32 %v823, 16
        %v877 = vrot.slane %v875, 5
        %v878 = vor.u32 %v874, %v877
        %v879 = vrot.slane %v878, 4
        %v881 = vshll.u32 %v824, 16
        %v883 = vrot.slane %v881, 5
        %v884 = vsel %vm258, %v879, %v883
        %v885 = vshrl.u32 %v824, 16
        %v887 = vrot.slane %v885, 4
        %v888 = vor.u32 %v887, %v883
        %v889 = vrot.slane %v888, 4
        %v891 = vshll.u32 %v855, 16
        %v893 = vrot.slane %v891, 5
        %v894 = vsel %vm258, %v889, %v893
        %v896 = vshrl.u32 %v825, 16
        %v898 = vrot.slane %v896, 4
        %v899 = vshll.u32 %v825, 16
        %v901 = vrot.slane %v899, 5
        %v902 = vor.u32 %v898, %v901
        %v903 = vrot.slane %v902, 4
        %v905 = vshll.u32 %v826, 16
        %v907 = vrot.slane %v905, 5
        %v908 = vsel %vm258, %v903, %v907
        %v909 = vshrl.u32 %v826, 16
        %v911 = vrot.slane %v909, 4
        %v912 = vor.u32 %v911, %v907
        %v913 = vrot.slane %v912, 4
        %v915 = vshll.u32 %v856, 16
        %v917 = vrot.slane %v915, 5
        %v918 = vsel %vm258, %v913, %v917
        %v920 = vshrl.u32 %v827, 16
        %v922 = vrot.slane %v920, 4
        %v923 = vshll.u32 %v827, 16
        %v925 = vrot.slane %v923, 5
        %v926 = vor.u32 %v922, %v925
        %v927 = vrot.slane %v926, 4
        %v929 = vshll.u32 %v828, 16
        %v931 = vrot.slane %v929, 5
        %v932 = vsel %vm258, %v927, %v931
        %v933 = vshrl.u32 %v828, 16
        %v935 = vrot.slane %v933, 4
        %v936 = vor.u32 %v935, %v931
        %v937 = vrot.slane %v936, 4
        %v939 = vshll.u32 %v857, 16
        %v941 = vrot.slane %v939, 5
        %v942 = vsel %vm258, %v937, %v941
        %v944 = vshrl.u32 %v829, 16
        %v946 = vrot.slane %v944, 4
        %v947 = vshll.u32 %v829, 16
        %v949 = vrot.slane %v947, 5
        %v950 = vor.u32 %v946, %v949
        %v951 = vrot.slane %v950, 4
        %v953 = vshll.u32 %v830, 16
        %v955 = vrot.slane %v953, 5
        %v956 = vsel %vm258, %v951, %v955
        %v957 = vshrl.u32 %v830, 16
        %v959 = vrot.slane %v957, 4
        %v960 = vor.u32 %v959, %v955
        %v961 = vrot.slane %v960, 4
        %v963 = vshll.u32 %v858, 16
        %v965 = vrot.slane %v963, 5
        %v966 = vsel %vm258, %v961, %v965
        %v968 = vshrl.u32 %v831, 16
        %v970 = vrot.slane %v968, 4
        %v971 = vshll.u32 %v831, 16
        %v973 = vrot.slane %v971, 5
        %v974 = vor.u32 %v970, %v973
        %v975 = vrot.slane %v974, 4
        %v977 = vshll.u32 %v832, 16
        %v979 = vrot.slane %v977, 5
        %v980 = vsel %vm258, %v975, %v979
        %v981 = vshrl.u32 %v832, 16
        %v983 = vrot.slane %v981, 4
        %v984 = vor.u32 %v983, %v979
        %v985 = vrot.slane %v984, 4
        %v987 = vshll.u32 %v859, 16
        %v989 = vrot.slane %v987, 5
        %v990 = vsel %vm258, %v985, %v989
        %v992 = vshrl.u32 %v833, 16
        %v994 = vrot.slane %v992, 4
        %v995 = vshll.u32 %v833, 16
        %v997 = vrot.slane %v995, 5
        %v998 = vor.u32 %v994, %v997
        %v999 = vrot.slane %v998, 4
        %v1001 = vshll.u32 %v834, 16
        %v1003 = vrot.slane %v1001, 5
        %v1004 = vsel %vm258, %v999, %v1003
        %v1005 = vshrl.u32 %v834, 16
        %v1007 = vrot.slane %v1005, 4
        %v1008 = vor.u32 %v1007, %v1003
        %v1009 = vrot.slane %v1008, 4
        %v1011 = vshll.u32 %v860, 16
        %v1013 = vrot.slane %v1011, 5
        %v1014 = vsel %vm258, %v1009, %v1013
        %v1016 = vshrl.u32 %v835, 16
        %v1018 = vrot.slane %v1016, 4
        %v1019 = vshll.u32 %v835, 16
        %v1021 = vrot.slane %v1019, 5
        %v1022 = vor.u32 %v1018, %v1021
        %v1023 = vrot.slane %v1022, 4
        %v1025 = vshll.u32 %v836, 16
        %v1027 = vrot.slane %v1025, 5
        %v1028 = vsel %vm258, %v1023, %v1027
        %v1029 = vshrl.u32 %v836, 16
        %v1031 = vrot.slane %v1029, 4
        %v1032 = vor.u32 %v1031, %v1027
        %v1033 = vrot.slane %v1032, 4
        %v1035 = vshll.u32 %v861, 16
        %v1037 = vrot.slane %v1035, 5
        %v1038 = vsel %vm258, %v1033, %v1037
        %v1040 = vshrl.u32 %v837, 16
        %v1042 = vrot.slane %v1040, 4
        %v1043 = vshll.u32 %v837, 16
        %v1045 = vrot.slane %v1043, 5
        %v1046 = vor.u32 %v1042, %v1045
        %v1047 = vrot.slane %v1046, 4
        %v1049 = vshll.u32 %v838, 16
        %v1051 = vrot.slane %v1049, 5
        %v1052 = vsel %vm258, %v1047, %v1051
        %v1053 = vshrl.u32 %v838, 16
        %v1055 = vrot.slane %v1053, 4
        %v1056 = vor.u32 %v1055, %v1051
        %v1057 = vrot.slane %v1056, 4
        %v1059 = vshll.u32 %v862, 16
        %v1061 = vrot.slane %v1059, 5
        %v1062 = vsel %vm258, %v1057, %v1061
        %v1064 = vshrl.u32 %v839, 16
        %v1066 = vrot.slane %v1064, 4
        %v1067 = vshll.u32 %v839, 16
        %v1069 = vrot.slane %v1067, 5
        %v1070 = vor.u32 %v1066, %v1069
        %v1071 = vrot.slane %v1070, 4
        %v1073 = vshll.u32 %v840, 16
        %v1075 = vrot.slane %v1073, 5
        %v1076 = vsel %vm258, %v1071, %v1075
        %v1077 = vshrl.u32 %v840, 16
        %v1079 = vrot.slane %v1077, 4
        %v1080 = vor.u32 %v1079, %v1075
        %v1081 = vrot.slane %v1080, 4
        %v1083 = vshll.u32 %v863, 16
        %v1085 = vrot.slane %v1083, 5
        %v1086 = vsel %vm258, %v1081, %v1085
        %v1088 = vshrl.u32 %v841, 16
        %v1090 = vrot.slane %v1088, 4
        %v1091 = vshll.u32 %v841, 16
        %v1093 = vrot.slane %v1091, 5
        %v1094 = vor.u32 %v1090, %v1093
        %v1095 = vrot.slane %v1094, 4
        %v1097 = vshll.u32 %v842, 16
        %v1099 = vrot.slane %v1097, 5
        %v1100 = vsel %vm258, %v1095, %v1099
        %v1101 = vshrl.u32 %v842, 16
        %v1103 = vrot.slane %v1101, 4
        %v1104 = vor.u32 %v1103, %v1099
        %v1105 = vrot.slane %v1104, 4
        %v1107 = vshll.u32 %v864, 16
        %v1109 = vrot.slane %v1107, 5
        %v1110 = vsel %vm258, %v1105, %v1109
        %v1112 = vshrl.u32 %v843, 16
        %v1114 = vrot.slane %v1112, 4
        %v1115 = vshll.u32 %v843, 16
        %v1117 = vrot.slane %v1115, 5
        %v1118 = vor.u32 %v1114, %v1117
        %v1119 = vrot.slane %v1118, 4
        %v1121 = vshll.u32 %v844, 16
        %v1123 = vrot.slane %v1121, 5
        %v1124 = vsel %vm258, %v1119, %v1123
        %v1125 = vshrl.u32 %v844, 16
        %v1127 = vrot.slane %v1125, 4
        %v1128 = vor.u32 %v1127, %v1123
        %v1129 = vrot.slane %v1128, 4
        %v1131 = vshll.u32 %v865, 16
        %v1133 = vrot.slane %v1131, 5
        %v1134 = vsel %vm258, %v1129, %v1133
        %v1136 = vshrl.u32 %v845, 16
        %v1138 = vrot.slane %v1136, 4
        %v1139 = vshll.u32 %v845, 16
        %v1141 = vrot.slane %v1139, 5
        %v1142 = vor.u32 %v1138, %v1141
        %v1143 = vrot.slane %v1142, 4
        %v1145 = vshll.u32 %v846, 16
        %v1147 = vrot.slane %v1145, 5
        %v1148 = vsel %vm258, %v1143, %v1147
        %v1149 = vshrl.u32 %v846, 16
        %v1151 = vrot.slane %v1149, 4
        %v1152 = vor.u32 %v1151, %v1147
        %v1153 = vrot.slane %v1152, 4
        %v1155 = vshll.u32 %v866, 16
        %v1157 = vrot.slane %v1155, 5
        %v1158 = vsel %vm258, %v1153, %v1157
        %v1160 = vshrl.u32 %v847, 16
        %v1162 = vrot.slane %v1160, 4
        %v1163 = vshll.u32 %v847, 16
        %v1165 = vrot.slane %v1163, 5
        %v1166 = vor.u32 %v1162, %v1165
        %v1167 = vrot.slane %v1166, 4
        %v1169 = vshll.u32 %v848, 16
        %v1171 = vrot.slane %v1169, 5
        %v1172 = vsel %vm258, %v1167, %v1171
        %v1173 = vshrl.u32 %v848, 16
        %v1175 = vrot.slane %v1173, 4
        %v1176 = vor.u32 %v1175, %v1171
        %v1177 = vrot.slane %v1176, 4
        %v1179 = vshll.u32 %v867, 16
        %v1181 = vrot.slane %v1179, 5
        %v1182 = vsel %vm258, %v1177, %v1181
        %v1184 = vshrl.u32 %v849, 16
        %v1186 = vrot.slane %v1184, 4
        %v1187 = vshll.u32 %v849, 16
        %v1189 = vrot.slane %v1187, 5
        %v1190 = vor.u32 %v1186, %v1189
        %v1191 = vrot.slane %v1190, 4
        %v1193 = vshll.u32 %v850, 16
        %v1195 = vrot.slane %v1193, 5
        %v1196 = vsel %vm258, %v1191, %v1195
        %v1197 = vshrl.u32 %v850, 16
        %v1199 = vrot.slane %v1197, 4
        %v1200 = vor.u32 %v1199, %v1195
        %v1201 = vrot.slane %v1200, 4
        %v1203 = vshll.u32 %v868, 16
        %v1205 = vrot.slane %v1203, 5
        %v1206 = vsel %vm258, %v1201, %v1205
        %v1208 = vshrl.u32 %v851, 16
        %v1210 = vrot.slane %v1208, 4
        %v1211 = vshll.u32 %v851, 16
        %v1213 = vrot.slane %v1211, 5
        %v1214 = vor.u32 %v1210, %v1213
        %v1215 = vrot.slane %v1214, 4
        %v1217 = vshll.u32 %v852, 16
        %v1219 = vrot.slane %v1217, 5
        %v1220 = vsel %vm258, %v1215, %v1219
        %v1221 = vshrl.u32 %v852, 16
        %v1223 = vrot.slane %v1221, 4
        %v1224 = vor.u32 %v1223, %v1219
        %v1225 = vrot.slane %v1224, 4
        %v1227 = vshll.u32 %v869, 16
        %v1229 = vrot.slane %v1227, 5
        %v1230 = vsel %vm258, %v1225, %v1229
        %v1232 = vshrl.u32 %v853, 16
        %v1234 = vrot.slane %v1232, 4
        %v1235 = vshll.u32 %v853, 16
        %v1237 = vrot.slane %v1235, 5
        %v1238 = vor.u32 %v1234, %v1237
        %v1239 = vrot.slane %v1238, 4
        %v1241 = vshll.u32 %v854, 16
        %v1243 = vrot.slane %v1241, 5
        %v1244 = vsel %vm258, %v1239, %v1243
        %v1245 = vshrl.u32 %v854, 16
        %v1247 = vrot.slane %v1245, 4
        %v1248 = vor.u32 %v1247, %v1243
        %v1249 = vrot.slane %v1248, 4
        %v1251 = vshll.u32 %v870, 16
        %v1253 = vrot.slane %v1251, 5
        %v1254 = vsel %vm258, %v1249, %v1253
        %v1255 = vld [vmem:[%s822] sm:$0xe]
        %v1256 = vld [vmem:[%s822 + $0xc] sm:$0xe]
        %v1257 = vld [vmem:[%s822 + $0x18] sm:$0xe]
        %v1258 = vld [vmem:[%s822 + $0x24] sm:$0xe]
        %v1259 = vld [vmem:[%s822 + $0x30] sm:$0xe]
        %v1260 = vld [vmem:[%s822 + $0x3c] sm:$0xe]
        %v1261 = vld [vmem:[%s822 + $0x48] sm:$0xe]
        %v1262 = vld [vmem:[%s822 + $0x54] sm:$0xe]
        %v1263 = vld [vmem:[%s822 + $0x60] sm:$0xe]
        %v1264 = vld [vmem:[%s822 + $0x6c] sm:$0xe]
        %v1265 = vld [vmem:[%s822 + $0x78] sm:$0xe]
        %v1266 = vld [vmem:[%s822 + $0x84] sm:$0xe]
        %v1267 = vld [vmem:[%s822 + $0x90] sm:$0xe]
        %v1268 = vld [vmem:[%s822 + $0x9c] sm:$0xe]
        %v1269 = vld [vmem:[%s822 + $0xa8] sm:$0xe]
        %v1270 = vld [vmem:[%s822 + $0xb4] sm:$0xe]
        %v1319 = vrot.slane %v1255, 5
        %v1320 = vrot.slane %v1319, 4
        %v1321 = vrot.slane %v824, 5
        %v1322 = vsel %vm709, %v1320, %v1321
        %v1323 = vrot.slane %v1321, 4
        %v1324 = vrot.slane %v855, 5
        %v1325 = vsel %vm709, %v1323, %v1324
        %v1326 = vrot.slane %v1256, 5
        %v1327 = vrot.slane %v1326, 4
        %v1328 = vrot.slane %v826, 5
        %v1329 = vsel %vm709, %v1327, %v1328
        %v1330 = vrot.slane %v1328, 4
        %v1331 = vrot.slane %v856, 5
        %v1332 = vsel %vm709, %v1330, %v1331
        %v1333 = vrot.slane %v1257, 5
        %v1334 = vrot.slane %v1333, 4
        %v1335 = vrot.slane %v828, 5
        %v1336 = vsel %vm709, %v1334, %v1335
        %v1337 = vrot.slane %v1335, 4
        %v1338 = vrot.slane %v857, 5
        %v1339 = vsel %vm709, %v1337, %v1338
        %v1340 = vrot.slane %v1258, 5
        %v1341 = vrot.slane %v1340, 4
        %v1342 = vrot.slane %v830, 5
        %v1343 = vsel %vm709, %v1341, %v1342
        %v1344 = vrot.slane %v1342, 4
        %v1345 = vrot.slane %v858, 5
        %v1346 = vsel %vm709, %v1344, %v1345
        %v1347 = vrot.slane %v1259, 5
        %v1348 = vrot.slane %v1347, 4
        %v1349 = vrot.slane %v832, 5
        %v1350 = vsel %vm709, %v1348, %v1349
        %v1351 = vrot.slane %v1349, 4
        %v1352 = vrot.slane %v859, 5
        %v1353 = vsel %vm709, %v1351, %v1352
        %v1354 = vrot.slane %v1260, 5
        %v1355 = vrot.slane %v1354, 4
        %v1356 = vrot.slane %v834, 5
        %v1357 = vsel %vm709, %v1355, %v1356
        %v1358 = vrot.slane %v1356, 4
        %v1359 = vrot.slane %v860, 5
        %v1360 = vsel %vm709, %v1358, %v1359
        %v1361 = vrot.slane %v1261, 5
        %v1362 = vrot.slane %v1361, 4
        %v1363 = vrot.slane %v836, 5
        %v1364 = vsel %vm709, %v1362, %v1363
        %v1365 = vrot.slane %v1363, 4
        %v1366 = vrot.slane %v861, 5
        %v1367 = vsel %vm709, %v1365, %v1366
        %v1368 = vrot.slane %v1262, 5
        %v1369 = vrot.slane %v1368, 4
        %v1370 = vrot.slane %v838, 5
        %v1371 = vsel %vm709, %v1369, %v1370
        %v1372 = vrot.slane %v1370, 4
        %v1373 = vrot.slane %v862, 5
        %v1374 = vsel %vm709, %v1372, %v1373
        %v1375 = vrot.slane %v1263, 5
        %v1376 = vrot.slane %v1375, 4
        %v1377 = vrot.slane %v840, 5
        %v1378 = vsel %vm709, %v1376, %v1377
        %v1379 = vrot.slane %v1377, 4
        %v1380 = vrot.slane %v863, 5
        %v1381 = vsel %vm709, %v1379, %v1380
        %v1382 = vrot.slane %v1264, 5
        %v1383 = vrot.slane %v1382, 4
        %v1384 = vrot.slane %v842, 5
        %v1385 = vsel %vm709, %v1383, %v1384
        %v1386 = vrot.slane %v1384, 4
        %v1387 = vrot.slane %v864, 5
        %v1388 = vsel %vm709, %v1386, %v1387
        %v1389 = vrot.slane %v1265, 5
        %v1390 = vrot.slane %v1389, 4
        %v1391 = vrot.slane %v844, 5
        %v1392 = vsel %vm709, %v1390, %v1391
        %v1393 = vrot.slane %v1391, 4
        %v1394 = vrot.slane %v865, 5
        %v1395 = vsel %vm709, %v1393, %v1394
        %v1396 = vrot.slane %v1266, 5
        %v1397 = vrot.slane %v1396, 4
        %v1398 = vrot.slane %v846, 5
        %v1399 = vsel %vm709, %v1397, %v1398
        %v1400 = vrot.slane %v1398, 4
        %v1401 = vrot.slane %v866, 5
        %v1402 = vsel %vm709, %v1400, %v1401
        %v1403 = vrot.slane %v1267, 5
        %v1404 = vrot.slane %v1403, 4
        %v1405 = vrot.slane %v848, 5
        %v1406 = vsel %vm709, %v1404, %v1405
        %v1407 = vrot.slane %v1405, 4
        %v1408 = vrot.slane %v867, 5
        %v1409 = vsel %vm709, %v1407, %v1408
        %v1410 = vrot.slane %v1268, 5
        %v1411 = vrot.slane %v1410, 4
        %v1412 = vrot.slane %v850, 5
        %v1413 = vsel %vm709, %v1411, %v1412
        %v1414 = vrot.slane %v1412, 4
        %v1415 = vrot.slane %v868, 5
        %v1416 = vsel %vm709, %v1414, %v1415
        %v1417 = vrot.slane %v1269, 5
        %v1418 = vrot.slane %v1417, 4
        %v1419 = vrot.slane %v852, 5
        %v1420 = vsel %vm709, %v1418, %v1419
        %v1421 = vrot.slane %v1419, 4
        %v1422 = vrot.slane %v869, 5
        %v1423 = vsel %vm709, %v1421, %v1422
        %v1424 = vrot.slane %v1270, 5
        %v1425 = vrot.slane %v1424, 4
        %v1426 = vrot.slane %v854, 5
        %v1427 = vsel %vm709, %v1425, %v1426
        %v1428 = vrot.slane %v1426, 4
        %v1429 = vrot.slane %v870, 5
        %v1430 = vsel %vm709, %v1428, %v1429
        %s1431 = scalar_lea.vmem %s206, 24
        %v1432 = vld [vmem:[%s1431] sm:$0xf]
        %v1433 = vld [vmem:[%s1431 + $0x4] sm:$0xf]
        %v1434 = vld [vmem:[%s1431 + $0xc] sm:$0xf]
        %v1435 = vld [vmem:[%s1431 + $0x10] sm:$0xf]
        %v1436 = vld [vmem:[%s1431 + $0x18] sm:$0xf]
        %v1437 = vld [vmem:[%s1431 + $0x1c] sm:$0xf]
        %v1438 = vld [vmem:[%s1431 + $0x24] sm:$0xf]
        %v1439 = vld [vmem:[%s1431 + $0x28] sm:$0xf]
        %v1440 = vld [vmem:[%s1431 + $0x30] sm:$0xf]
        %v1441 = vld [vmem:[%s1431 + $0x34] sm:$0xf]
        %v1442 = vld [vmem:[%s1431 + $0x3c] sm:$0xf]
        %v1443 = vld [vmem:[%s1431 + $0x40] sm:$0xf]
        %v1444 = vld [vmem:[%s1431 + $0x48] sm:$0xf]
        %v1445 = vld [vmem:[%s1431 + $0x4c] sm:$0xf]
        %v1446 = vld [vmem:[%s1431 + $0x54] sm:$0xf]
        %v1447 = vld [vmem:[%s1431 + $0x58] sm:$0xf]
        %v1448 = vld [vmem:[%s1431 + $0x60] sm:$0xf]
        %v1449 = vld [vmem:[%s1431 + $0x64] sm:$0xf]
        %v1450 = vld [vmem:[%s1431 + $0x6c] sm:$0xf]
        %v1451 = vld [vmem:[%s1431 + $0x70] sm:$0xf]
        %v1452 = vld [vmem:[%s1431 + $0x78] sm:$0xf]
        %v1453 = vld [vmem:[%s1431 + $0x7c] sm:$0xf]
        %v1454 = vld [vmem:[%s1431 + $0x84] sm:$0xf]
        %v1455 = vld [vmem:[%s1431 + $0x88] sm:$0xf]
        %v1456 = vld [vmem:[%s1431 + $0x90] sm:$0xf]
        %v1457 = vld [vmem:[%s1431 + $0x94] sm:$0xf]
        %v1458 = vld [vmem:[%s1431 + $0x9c] sm:$0xf]
        %v1459 = vld [vmem:[%s1431 + $0xa0] sm:$0xf]
        %v1460 = vld [vmem:[%s1431 + $0xa8] sm:$0xf]
        %v1461 = vld [vmem:[%s1431 + $0xac] sm:$0xf]
        %v1462 = vld [vmem:[%s1431 + $0xb4] sm:$0xf]
        %v1463 = vld [vmem:[%s1431 + $0xb8] sm:$0xf]
        %v1464 = vld [vmem:[%s1431 + $0x8] sm:$0x1]
        %v1465 = vld [vmem:[%s1431 + $0x14] sm:$0x1]
        %v1466 = vld [vmem:[%s1431 + $0x20] sm:$0x1]
        %v1467 = vld [vmem:[%s1431 + $0x2c] sm:$0x1]
        %v1468 = vld [vmem:[%s1431 + $0x38] sm:$0x1]
        %v1469 = vld [vmem:[%s1431 + $0x44] sm:$0x1]
        %v1470 = vld [vmem:[%s1431 + $0x50] sm:$0x1]
        %v1471 = vld [vmem:[%s1431 + $0x5c] sm:$0x1]
        %v1472 = vld [vmem:[%s1431 + $0x68] sm:$0x1]
        %v1473 = vld [vmem:[%s1431 + $0x74] sm:$0x1]
        %v1474 = vld [vmem:[%s1431 + $0x80] sm:$0x1]
        %v1475 = vld [vmem:[%s1431 + $0x8c] sm:$0x1]
        %v1476 = vld [vmem:[%s1431 + $0x98] sm:$0x1]
        %v1477 = vld [vmem:[%s1431 + $0xa4] sm:$0x1]
        %v1478 = vld [vmem:[%s1431 + $0xb0] sm:$0x1]
        %v1479 = vld [vmem:[%s1431 + $0xbc] sm:$0x1]
        %v1481 = vshrl.u32 %v1432, 16
        %v1483 = vrot.slane %v1481, 4
        %v1484 = vshll.u32 %v1432, 16
        %v1486 = vrot.slane %v1484, 5
        %v1487 = vor.u32 %v1483, %v1486
        %v1488 = vrot.slane %v1487, 4
        %v1490 = vshll.u32 %v1433, 16
        %v1492 = vrot.slane %v1490, 5
        %v1493 = vsel %vm258, %v1488, %v1492
        %v1494 = vshrl.u32 %v1433, 16
        %v1496 = vrot.slane %v1494, 4
        %v1497 = vor.u32 %v1496, %v1492
        %v1498 = vrot.slane %v1497, 4
        %v1500 = vshll.u32 %v1464, 16
        %v1502 = vrot.slane %v1500, 5
        %v1503 = vsel %vm258, %v1498, %v1502
        %v1505 = vshrl.u32 %v1434, 16
        %v1507 = vrot.slane %v1505, 4
        %v1508 = vshll.u32 %v1434, 16
        %v1510 = vrot.slane %v1508, 5
        %v1511 = vor.u32 %v1507, %v1510
        %v1512 = vrot.slane %v1511, 4
        %v1514 = vshll.u32 %v1435, 16
        %v1516 = vrot.slane %v1514, 5
        %v1517 = vsel %vm258, %v1512, %v1516
        %v1518 = vshrl.u32 %v1435, 16
        %v1520 = vrot.slane %v1518, 4
        %v1521 = vor.u32 %v1520, %v1516
        %v1522 = vrot.slane %v1521, 4
        %v1524 = vshll.u32 %v1465, 16
        %v1526 = vrot.slane %v1524, 5
        %v1527 = vsel %vm258, %v1522, %v1526
        %v1529 = vshrl.u32 %v1436, 16
        %v1531 = vrot.slane %v1529, 4
        %v1532 = vshll.u32 %v1436, 16
        %v1534 = vrot.slane %v1532, 5
        %v1535 = vor.u32 %v1531, %v1534
        %v1536 = vrot.slane %v1535, 4
        %v1538 = vshll.u32 %v1437, 16
        %v1540 = vrot.slane %v1538, 5
        %v1541 = vsel %vm258, %v1536, %v1540
        %v1542 = vshrl.u32 %v1437, 16
        %v1544 = vrot.slane %v1542, 4
        %v1545 = vor.u32 %v1544, %v1540
        %v1546 = vrot.slane %v1545, 4
        %v1548 = vshll.u32 %v1466, 16
        %v1550 = vrot.slane %v1548, 5
        %v1551 = vsel %vm258, %v1546, %v1550
        %v1553 = vshrl.u32 %v1438, 16
        %v1555 = vrot.slane %v1553, 4
        %v1556 = vshll.u32 %v1438, 16
        %v1558 = vrot.slane %v1556, 5
        %v1559 = vor.u32 %v1555, %v1558
        %v1560 = vrot.slane %v1559, 4
        %v1562 = vshll.u32 %v1439, 16
        %v1564 = vrot.slane %v1562, 5
        %v1565 = vsel %vm258, %v1560, %v1564
        %v1566 = vshrl.u32 %v1439, 16
        %v1568 = vrot.slane %v1566, 4
        %v1569 = vor.u32 %v1568, %v1564
        %v1570 = vrot.slane %v1569, 4
        %v1572 = vshll.u32 %v1467, 16
        %v1574 = vrot.slane %v1572, 5
        %v1575 = vsel %vm258, %v1570, %v1574
        %v1577 = vshrl.u32 %v1440, 16
        %v1579 = vrot.slane %v1577, 4
        %v1580 = vshll.u32 %v1440, 16
        %v1582 = vrot.slane %v1580, 5
        %v1583 = vor.u32 %v1579, %v1582
        %v1584 = vrot.slane %v1583, 4
        %v1586 = vshll.u32 %v1441, 16
        %v1588 = vrot.slane %v1586, 5
        %v1589 = vsel %vm258, %v1584, %v1588
        %v1590 = vshrl.u32 %v1441, 16
        %v1592 = vrot.slane %v1590, 4
        %v1593 = vor.u32 %v1592, %v1588
        %v1594 = vrot.slane %v1593, 4
        %v1596 = vshll.u32 %v1468, 16
        %v1598 = vrot.slane %v1596, 5
        %v1599 = vsel %vm258, %v1594, %v1598
        %v1601 = vshrl.u32 %v1442, 16
        %v1603 = vrot.slane %v1601, 4
        %v1604 = vshll.u32 %v1442, 16
        %v1606 = vrot.slane %v1604, 5
        %v1607 = vor.u32 %v1603, %v1606
        %v1608 = vrot.slane %v1607, 4
        %v1610 = vshll.u32 %v1443, 16
        %v1612 = vrot.slane %v1610, 5
        %v1613 = vsel %vm258, %v1608, %v1612
        %v1614 = vshrl.u32 %v1443, 16
        %v1616 = vrot.slane %v1614, 4
        %v1617 = vor.u32 %v1616, %v1612
        %v1618 = vrot.slane %v1617, 4
        %v1620 = vshll.u32 %v1469, 16
        %v1622 = vrot.slane %v1620, 5
        %v1623 = vsel %vm258, %v1618, %v1622
        %v1625 = vshrl.u32 %v1444, 16
        %v1627 = vrot.slane %v1625, 4
        %v1628 = vshll.u32 %v1444, 16
        %v1630 = vrot.slane %v1628, 5
        %v1631 = vor.u32 %v1627, %v1630
        %v1632 = vrot.slane %v1631, 4
        %v1634 = vshll.u32 %v1445, 16
        %v1636 = vrot.slane %v1634, 5
        %v1637 = vsel %vm258, %v1632, %v1636
        %v1638 = vshrl.u32 %v1445, 16
        %v1640 = vrot.slane %v1638, 4
        %v1641 = vor.u32 %v1640, %v1636
        %v1642 = vrot.slane %v1641, 4
        %v1644 = vshll.u32 %v1470, 16
        %v1646 = vrot.slane %v1644, 5
        %v1647 = vsel %vm258, %v1642, %v1646
        %v1649 = vshrl.u32 %v1446, 16
        %v1651 = vrot.slane %v1649, 4
        %v1652 = vshll.u32 %v1446, 16
        %v1654 = vrot.slane %v1652, 5
        %v1655 = vor.u32 %v1651, %v1654
        %v1656 = vrot.slane %v1655, 4
        %v1658 = vshll.u32 %v1447, 16
        %v1660 = vrot.slane %v1658, 5
        %v1661 = vsel %vm258, %v1656, %v1660
        %v1662 = vshrl.u32 %v1447, 16
        %v1664 = vrot.slane %v1662, 4
        %v1665 = vor.u32 %v1664, %v1660
        %v1666 = vrot.slane %v1665, 4
        %v1668 = vshll.u32 %v1471, 16
        %v1670 = vrot.slane %v1668, 5
        %v1671 = vsel %vm258, %v1666, %v1670
        %v1673 = vshrl.u32 %v1448, 16
        %v1675 = vrot.slane %v1673, 4
        %v1676 = vshll.u32 %v1448, 16
        %v1678 = vrot.slane %v1676, 5
        %v1679 = vor.u32 %v1675, %v1678
        %v1680 = vrot.slane %v1679, 4
        %v1682 = vshll.u32 %v1449, 16
        %v1684 = vrot.slane %v1682, 5
        %v1685 = vsel %vm258, %v1680, %v1684
        %v1686 = vshrl.u32 %v1449, 16
        %v1688 = vrot.slane %v1686, 4
        %v1689 = vor.u32 %v1688, %v1684
        %v1690 = vrot.slane %v1689, 4
        %v1692 = vshll.u32 %v1472, 16
        %v1694 = vrot.slane %v1692, 5
        %v1695 = vsel %vm258, %v1690, %v1694
        %v1697 = vshrl.u32 %v1450, 16
        %v1699 = vrot.slane %v1697, 4
        %v1700 = vshll.u32 %v1450, 16
        %v1702 = vrot.slane %v1700, 5
        %v1703 = vor.u32 %v1699, %v1702
        %v1704 = vrot.slane %v1703, 4
        %v1706 = vshll.u32 %v1451, 16
        %v1708 = vrot.slane %v1706, 5
        %v1709 = vsel %vm258, %v1704, %v1708
        %v1710 = vshrl.u32 %v1451, 16
        %v1712 = vrot.slane %v1710, 4
        %v1713 = vor.u32 %v1712, %v1708
        %v1714 = vrot.slane %v1713, 4
        %v1716 = vshll.u32 %v1473, 16
        %v1718 = vrot.slane %v1716, 5
        %v1719 = vsel %vm258, %v1714, %v1718
        %v1721 = vshrl.u32 %v1452, 16
        %v1723 = vrot.slane %v1721, 4
        %v1724 = vshll.u32 %v1452, 16
        %v1726 = vrot.slane %v1724, 5
        %v1727 = vor.u32 %v1723, %v1726
        %v1728 = vrot.slane %v1727, 4
        %v1730 = vshll.u32 %v1453, 16
        %v1732 = vrot.slane %v1730, 5
        %v1733 = vsel %vm258, %v1728, %v1732
        %v1734 = vshrl.u32 %v1453, 16
        %v1736 = vrot.slane %v1734, 4
        %v1737 = vor.u32 %v1736, %v1732
        %v1738 = vrot.slane %v1737, 4
        %v1740 = vshll.u32 %v1474, 16
        %v1742 = vrot.slane %v1740, 5
        %v1743 = vsel %vm258, %v1738, %v1742
        %v1745 = vshrl.u32 %v1454, 16
        %v1747 = vrot.slane %v1745, 4
        %v1748 = vshll.u32 %v1454, 16
        %v1750 = vrot.slane %v1748, 5
        %v1751 = vor.u32 %v1747, %v1750
        %v1752 = vrot.slane %v1751, 4
        %v1754 = vshll.u32 %v1455, 16
        %v1756 = vrot.slane %v1754, 5
        %v1757 = vsel %vm258, %v1752, %v1756
        %v1758 = vshrl.u32 %v1455, 16
        %v1760 = vrot.slane %v1758, 4
        %v1761 = vor.u32 %v1760, %v1756
        %v1762 = vrot.slane %v1761, 4
        %v1764 = vshll.u32 %v1475, 16
        %v1766 = vrot.slane %v1764, 5
        %v1767 = vsel %vm258, %v1762, %v1766
        %v1769 = vshrl.u32 %v1456, 16
        %v1771 = vrot.slane %v1769, 4
        %v1772 = vshll.u32 %v1456, 16
        %v1774 = vrot.slane %v1772, 5
        %v1775 = vor.u32 %v1771, %v1774
        %v1776 = vrot.slane %v1775, 4
        %v1778 = vshll.u32 %v1457, 16
        %v1780 = vrot.slane %v1778, 5
        %v1781 = vsel %vm258, %v1776, %v1780
        %v1782 = vshrl.u32 %v1457, 16
        %v1784 = vrot.slane %v1782, 4
        %v1785 = vor.u32 %v1784, %v1780
        %v1786 = vrot.slane %v1785, 4
        %v1788 = vshll.u32 %v1476, 16
        %v1790 = vrot.slane %v1788, 5
        %v1791 = vsel %vm258, %v1786, %v1790
        %v1793 = vshrl.u32 %v1458, 16
        %v1795 = vrot.slane %v1793, 4
        %v1796 = vshll.u32 %v1458, 16
        %v1798 = vrot.slane %v1796, 5
        %v1799 = vor.u32 %v1795, %v1798
        %v1800 = vrot.slane %v1799, 4
        %v1802 = vshll.u32 %v1459, 16
        %v1804 = vrot.slane %v1802, 5
        %v1805 = vsel %vm258, %v1800, %v1804
        %v1806 = vshrl.u32 %v1459, 16
        %v1808 = vrot.slane %v1806, 4
        %v1809 = vor.u32 %v1808, %v1804
        %v1810 = vrot.slane %v1809, 4
        %v1812 = vshll.u32 %v1477, 16
        %v1814 = vrot.slane %v1812, 5
        %v1815 = vsel %vm258, %v1810, %v1814
        %v1817 = vshrl.u32 %v1460, 16
        %v1819 = vrot.slane %v1817, 4
        %v1820 = vshll.u32 %v1460, 16
        %v1822 = vrot.slane %v1820, 5
        %v1823 = vor.u32 %v1819, %v1822
        %v1824 = vrot.slane %v1823, 4
        %v1826 = vshll.u32 %v1461, 16
        %v1828 = vrot.slane %v1826, 5
        %v1829 = vsel %vm258, %v1824, %v1828
        %v1830 = vshrl.u32 %v1461, 16
        %v1832 = vrot.slane %v1830, 4
        %v1833 = vor.u32 %v1832, %v1828
        %v1834 = vrot.slane %v1833, 4
        %v1836 = vshll.u32 %v1478, 16
        %v1838 = vrot.slane %v1836, 5
        %v1839 = vsel %vm258, %v1834, %v1838
        %v1841 = vshrl.u32 %v1462, 16
        %v1843 = vrot.slane %v1841, 4
        %v1844 = vshll.u32 %v1462, 16
        %v1846 = vrot.slane %v1844, 5
        %v1847 = vor.u32 %v1843, %v1846
        %v1848 = vrot.slane %v1847, 4
        %v1850 = vshll.u32 %v1463, 16
        %v1852 = vrot.slane %v1850, 5
        %v1853 = vsel %vm258, %v1848, %v1852
        %v1854 = vshrl.u32 %v1463, 16
        %v1856 = vrot.slane %v1854, 4
        %v1857 = vor.u32 %v1856, %v1852
        %v1858 = vrot.slane %v1857, 4
        %v1860 = vshll.u32 %v1479, 16
        %v1862 = vrot.slane %v1860, 5
        %v1863 = vsel %vm258, %v1858, %v1862
        %v1864 = vld [vmem:[%s1431] sm:$0xe]
        %v1865 = vld [vmem:[%s1431 + $0xc] sm:$0xe]
        %v1866 = vld [vmem:[%s1431 + $0x18] sm:$0xe]
        %v1867 = vld [vmem:[%s1431 + $0x24] sm:$0xe]
        %v1868 = vld [vmem:[%s1431 + $0x30] sm:$0xe]
        %v1869 = vld [vmem:[%s1431 + $0x3c] sm:$0xe]
        %v1870 = vld [vmem:[%s1431 + $0x48] sm:$0xe]
        %v1871 = vld [vmem:[%s1431 + $0x54] sm:$0xe]
        %v1872 = vld [vmem:[%s1431 + $0x60] sm:$0xe]
        %v1873 = vld [vmem:[%s1431 + $0x6c] sm:$0xe]
        %v1874 = vld [vmem:[%s1431 + $0x78] sm:$0xe]
        %v1875 = vld [vmem:[%s1431 + $0x84] sm:$0xe]
        %v1876 = vld [vmem:[%s1431 + $0x90] sm:$0xe]
        %v1877 = vld [vmem:[%s1431 + $0x9c] sm:$0xe]
        %v1878 = vld [vmem:[%s1431 + $0xa8] sm:$0xe]
        %v1879 = vld [vmem:[%s1431 + $0xb4] sm:$0xe]
        %v1928 = vrot.slane %v1864, 5
        %v1929 = vrot.slane %v1928, 4
        %v1930 = vrot.slane %v1433, 5
        %v1931 = vsel %vm709, %v1929, %v1930
        %v1932 = vrot.slane %v1930, 4
        %v1933 = vrot.slane %v1464, 5
        %v1934 = vsel %vm709, %v1932, %v1933
        %v1935 = vrot.slane %v1865, 5
        %v1936 = vrot.slane %v1935, 4
        %v1937 = vrot.slane %v1435, 5
        %v1938 = vsel %vm709, %v1936, %v1937
        %v1939 = vrot.slane %v1937, 4
        %v1940 = vrot.slane %v1465, 5
        %v1941 = vsel %vm709, %v1939, %v1940
        %v1942 = vrot.slane %v1866, 5
        %v1943 = vrot.slane %v1942, 4
        %v1944 = vrot.slane %v1437, 5
        %v1945 = vsel %vm709, %v1943, %v1944
        %v1946 = vrot.slane %v1944, 4
        %v1947 = vrot.slane %v1466, 5
        %v1948 = vsel %vm709, %v1946, %v1947
        %v1949 = vrot.slane %v1867, 5
        %v1950 = vrot.slane %v1949, 4
        %v1951 = vrot.slane %v1439, 5
        %v1952 = vsel %vm709, %v1950, %v1951
        %v1953 = vrot.slane %v1951, 4
        %v1954 = vrot.slane %v1467, 5
        %v1955 = vsel %vm709, %v1953, %v1954
        %v1956 = vrot.slane %v1868, 5
        %v1957 = vrot.slane %v1956, 4
        %v1958 = vrot.slane %v1441, 5
        %v1959 = vsel %vm709, %v1957, %v1958
        %v1960 = vrot.slane %v1958, 4
        %v1961 = vrot.slane %v1468, 5
        %v1962 = vsel %vm709, %v1960, %v1961
        %v1963 = vrot.slane %v1869, 5
        %v1964 = vrot.slane %v1963, 4
        %v1965 = vrot.slane %v1443, 5
        %v1966 = vsel %vm709, %v1964, %v1965
        %v1967 = vrot.slane %v1965, 4
        %v1968 = vrot.slane %v1469, 5
        %v1969 = vsel %vm709, %v1967, %v1968
        %v1970 = vrot.slane %v1870, 5
        %v1971 = vrot.slane %v1970, 4
        %v1972 = vrot.slane %v1445, 5
        %v1973 = vsel %vm709, %v1971, %v1972
        %v1974 = vrot.slane %v1972, 4
        %v1975 = vrot.slane %v1470, 5
        %v1976 = vsel %vm709, %v1974, %v1975
        %v1977 = vrot.slane %v1871, 5
        %v1978 = vrot.slane %v1977, 4
        %v1979 = vrot.slane %v1447, 5
        %v1980 = vsel %vm709, %v1978, %v1979
        %v1981 = vrot.slane %v1979, 4
        %v1982 = vrot.slane %v1471, 5
        %v1983 = vsel %vm709, %v1981, %v1982
        %v1984 = vrot.slane %v1872, 5
        %v1985 = vrot.slane %v1984, 4
        %v1986 = vrot.slane %v1449, 5
        %v1987 = vsel %vm709, %v1985, %v1986
        %v1988 = vrot.slane %v1986, 4
        %v1989 = vrot.slane %v1472, 5
        %v1990 = vsel %vm709, %v1988, %v1989
        %v1991 = vrot.slane %v1873, 5
        %v1992 = vrot.slane %v1991, 4
        %v1993 = vrot.slane %v1451, 5
        %v1994 = vsel %vm709, %v1992, %v1993
        %v1995 = vrot.slane %v1993, 4
        %v1996 = vrot.slane %v1473, 5
        %v1997 = vsel %vm709, %v1995, %v1996
        %v1998 = vrot.slane %v1874, 5
        %v1999 = vrot.slane %v1998, 4
        %v2000 = vrot.slane %v1453, 5
        %v2001 = vsel %vm709, %v1999, %v2000
        %v2002 = vrot.slane %v2000, 4
        %v2003 = vrot.slane %v1474, 5
        %v2004 = vsel %vm709, %v2002, %v2003
        %v2005 = vrot.slane %v1875, 5
        %v2006 = vrot.slane %v2005, 4
        %v2007 = vrot.slane %v1455, 5
        %v2008 = vsel %vm709, %v2006, %v2007
        %v2009 = vrot.slane %v2007, 4
        %v2010 = vrot.slane %v1475, 5
        %v2011 = vsel %vm709, %v2009, %v2010
        %v2012 = vrot.slane %v1876, 5
        %v2013 = vrot.slane %v2012, 4
        %v2014 = vrot.slane %v1457, 5
        %v2015 = vsel %vm709, %v2013, %v2014
        %v2016 = vrot.slane %v2014, 4
        %v2017 = vrot.slane %v1476, 5
        %v2018 = vsel %vm709, %v2016, %v2017
        %v2019 = vrot.slane %v1877, 5
        %v2020 = vrot.slane %v2019, 4
        %v2021 = vrot.slane %v1459, 5
        %v2022 = vsel %vm709, %v2020, %v2021
        %v2023 = vrot.slane %v2021, 4
        %v2024 = vrot.slane %v1477, 5
        %v2025 = vsel %vm709, %v2023, %v2024
        %v2026 = vrot.slane %v1878, 5
        %v2027 = vrot.slane %v2026, 4
        %v2028 = vrot.slane %v1461, 5
        %v2029 = vsel %vm709, %v2027, %v2028
        %v2030 = vrot.slane %v2028, 4
        %v2031 = vrot.slane %v1478, 5
        %v2032 = vsel %vm709, %v2030, %v2031
        %v2033 = vrot.slane %v1879, 5
        %v2034 = vrot.slane %v2033, 4
        %v2035 = vrot.slane %v1463, 5
        %v2036 = vsel %vm709, %v2034, %v2035
        %v2037 = vrot.slane %v2035, 4
        %v2038 = vrot.slane %v1479, 5
        %v2039 = vsel %vm709, %v2037, %v2038
        %v2056 = vunpack.c.l.b16 %v208
        %v2057 = vunpack.c.l.b16 %v209
        %v2058 = vunpack.c.l.b16 %v210
        %v2059 = vunpack.c.l.b16 %v211
        %v2060 = vunpack.c.l.b16 %v212
        %v2061 = vunpack.c.l.b16 %v213
        %v2062 = vunpack.c.l.b16 %v214
        %v2063 = vunpack.c.l.b16 %v215
        %v2064 = vunpack.c.l.b16 %v216
        %v2065 = vunpack.c.l.b16 %v217
        %v2066 = vunpack.c.l.b16 %v218
        %v2067 = vunpack.c.l.b16 %v219
        %v2068 = vunpack.c.l.b16 %v220
        %v2069 = vunpack.c.l.b16 %v221
        %v2070 = vunpack.c.l.b16 %v222
        %v2071 = vunpack.c.l.b16 %v223
        %v2072 = vunpack.c.l.b16 %v224
        %v2073 = vunpack.c.l.b16 %v225
        %v2074 = vunpack.c.l.b16 %v226
        %v2075 = vunpack.c.l.b16 %v227
        %v2076 = vunpack.c.l.b16 %v228
        %v2077 = vunpack.c.l.b16 %v229
        %v2078 = vunpack.c.l.b16 %v230
        %v2079 = vunpack.c.l.b16 %v231
        %v2080 = vunpack.c.l.b16 %v232
        %v2081 = vunpack.c.l.b16 %v233
        %v2082 = vunpack.c.l.b16 %v234
        %v2083 = vunpack.c.l.b16 %v235
        %v2084 = vunpack.c.l.b16 %v236
        %v2085 = vunpack.c.l.b16 %v237
        %v2086 = vunpack.c.l.b16 %v238
        %v2087 = vunpack.c.l.b16 %v239
        %v2088 = vpack.c.b16 %v2057, %v2056
        %v2089 = vpack.c.b16 %v2059, %v2058
        %v2090 = vpack.c.b16 %v2061, %v2060
        %v2091 = vpack.c.b16 %v2063, %v2062
        %v2092 = vpack.c.b16 %v2065, %v2064
        %v2093 = vpack.c.b16 %v2067, %v2066
        %v2094 = vpack.c.b16 %v2069, %v2068
        %v2095 = vpack.c.b16 %v2071, %v2070
        %v2096 = vpack.c.b16 %v2073, %v2072
        %v2097 = vpack.c.b16 %v2075, %v2074
        %v2098 = vpack.c.b16 %v2077, %v2076
        %v2099 = vpack.c.b16 %v2079, %v2078
        %v2100 = vpack.c.b16 %v2081, %v2080
        %v2101 = vpack.c.b16 %v2083, %v2082
        %v2102 = vpack.c.b16 %v2085, %v2084
        %v2103 = vpack.c.b16 %v2087, %v2086
        %v2104 = vunpack.c.l.b16 %v272
        %v2105 = vunpack.c.l.b16 %v282
        %v2106 = vunpack.c.l.b16 %v296
        %v2107 = vunpack.c.l.b16 %v306
        %v2108 = vunpack.c.l.b16 %v320
        %v2109 = vunpack.c.l.b16 %v330
        %v2110 = vunpack.c.l.b16 %v344
        %v2111 = vunpack.c.l.b16 %v354
        %v2112 = vunpack.c.l.b16 %v368
        %v2113 = vunpack.c.l.b16 %v378
        %v2114 = vunpack.c.l.b16 %v392
        %v2115 = vunpack.c.l.b16 %v402
        %v2116 = vunpack.c.l.b16 %v416
        %v2117 = vunpack.c.l.b16 %v426
        %v2118 = vunpack.c.l.b16 %v440
        %v2119 = vunpack.c.l.b16 %v450
        %v2120 = vunpack.c.l.b16 %v464
        %v2121 = vunpack.c.l.b16 %v474
        %v2122 = vunpack.c.l.b16 %v488
        %v2123 = vunpack.c.l.b16 %v498
        %v2124 = vunpack.c.l.b16 %v512
        %v2125 = vunpack.c.l.b16 %v522
        %v2126 = vunpack.c.l.b16 %v536
        %v2127 = vunpack.c.l.b16 %v546
        %v2128 = vunpack.c.l.b16 %v560
        %v2129 = vunpack.c.l.b16 %v570
        %v2130 = vunpack.c.l.b16 %v584
        %v2131 = vunpack.c.l.b16 %v594
        %v2132 = vunpack.c.l.b16 %v608
        %v2133 = vunpack.c.l.b16 %v618
        %v2134 = vunpack.c.l.b16 %v632
        %v2135 = vunpack.c.l.b16 %v642
        %v2136 = vpack.c.b16 %v2105, %v2104
        %v2137 = vpack.c.b16 %v2107, %v2106
        %v2138 = vpack.c.b16 %v2109, %v2108
        %v2139 = vpack.c.b16 %v2111, %v2110
        %v2140 = vpack.c.b16 %v2113, %v2112
        %v2141 = vpack.c.b16 %v2115, %v2114
        %v2142 = vpack.c.b16 %v2117, %v2116
        %v2143 = vpack.c.b16 %v2119, %v2118
        %v2144 = vpack.c.b16 %v2121, %v2120
        %v2145 = vpack.c.b16 %v2123, %v2122
        %v2146 = vpack.c.b16 %v2125, %v2124
        %v2147 = vpack.c.b16 %v2127, %v2126
        %v2148 = vpack.c.b16 %v2129, %v2128
        %v2149 = vpack.c.b16 %v2131, %v2130
        %v2150 = vpack.c.b16 %v2133, %v2132
        %v2151 = vpack.c.b16 %v2135, %v2134
        %2152 = vrot.lane.b32.xlu0 %v2136, 4
        %v2153 = vpop.permute.xlu0 %2152
        %2154 = vrot.lane.b32.xlu0 %v2137, 4
        %v2155 = vpop.permute.xlu0 %2154
        %2156 = vrot.lane.b32.xlu0 %v2138, 4
        %v2157 = vpop.permute.xlu0 %2156
        %2158 = vrot.lane.b32.xlu0 %v2139, 4
        %v2159 = vpop.permute.xlu0 %2158
        %2160 = vrot.lane.b32.xlu0 %v2140, 4
        %v2161 = vpop.permute.xlu0 %2160
        %2162 = vrot.lane.b32.xlu0 %v2141, 4
        %v2163 = vpop.permute.xlu0 %2162
        %2164 = vrot.lane.b32.xlu0 %v2142, 4
        %v2165 = vpop.permute.xlu0 %2164
        %2166 = vrot.lane.b32.xlu0 %v2143, 4
        %v2167 = vpop.permute.xlu0 %2166
        %2168 = vrot.lane.b32.xlu0 %v2144, 4
        %v2169 = vpop.permute.xlu0 %2168
        %2170 = vrot.lane.b32.xlu0 %v2145, 4
        %v2171 = vpop.permute.xlu0 %2170
        %2172 = vrot.lane.b32.xlu0 %v2146, 4
        %v2173 = vpop.permute.xlu0 %2172
        %2174 = vrot.lane.b32.xlu0 %v2147, 4
        %v2175 = vpop.permute.xlu0 %2174
        %2176 = vrot.lane.b32.xlu0 %v2148, 4
        %v2177 = vpop.permute.xlu0 %2176
        %2178 = vrot.lane.b32.xlu0 %v2149, 4
        %v2179 = vpop.permute.xlu0 %2178
        %2180 = vrot.lane.b32.xlu0 %v2150, 4
        %v2181 = vpop.permute.xlu0 %2180
        %2182 = vrot.lane.b32.xlu0 %v2151, 4
        %v2183 = vpop.permute.xlu0 %2182
        %v2184 = vunpack.c.l.b16 %v713
        %v2185 = vunpack.c.l.b16 %v716
        %v2186 = vunpack.c.l.b16 %v720
        %v2187 = vunpack.c.l.b16 %v723
        %v2188 = vunpack.c.l.b16 %v727
        %v2189 = vunpack.c.l.b16 %v730
        %v2190 = vunpack.c.l.b16 %v734
        %v2191 = vunpack.c.l.b16 %v737
        %v2192 = vunpack.c.l.b16 %v741
        %v2193 = vunpack.c.l.b16 %v744
        %v2194 = vunpack.c.l.b16 %v748
        %v2195 = vunpack.c.l.b16 %v751
        %v2196 = vunpack.c.l.b16 %v755
        %v2197 = vunpack.c.l.b16 %v758
        %v2198 = vunpack.c.l.b16 %v762
        %v2199 = vunpack.c.l.b16 %v765
        %v2200 = vunpack.c.l.b16 %v769
        %v2201 = vunpack.c.l.b16 %v772
        %v2202 = vunpack.c.l.b16 %v776
        %v2203 = vunpack.c.l.b16 %v779
        %v2204 = vunpack.c.l.b16 %v783
        %v2205 = vunpack.c.l.b16 %v786
        %v2206 = vunpack.c.l.b16 %v790
        %v2207 = vunpack.c.l.b16 %v793
        %v2208 = vunpack.c.l.b16 %v797
        %v2209 = vunpack.c.l.b16 %v800
        %v2210 = vunpack.c.l.b16 %v804
        %v2211 = vunpack.c.l.b16 %v807
        %v2212 = vunpack.c.l.b16 %v811
        %v2213 = vunpack.c.l.b16 %v814
        %v2214 = vunpack.c.l.b16 %v818
        %v2215 = vunpack.c.l.b16 %v821
        %v2216 = vpack.c.b16 %v2185, %v2184
        %v2217 = vpack.c.b16 %v2187, %v2186
        %v2218 = vpack.c.b16 %v2189, %v2188
        %v2219 = vpack.c.b16 %v2191, %v2190
        %v2220 = vpack.c.b16 %v2193, %v2192
        %v2221 = vpack.c.b16 %v2195, %v2194
        %v2222 = vpack.c.b16 %v2197, %v2196
        %v2223 = vpack.c.b16 %v2199, %v2198
        %v2224 = vpack.c.b16 %v2201, %v2200
        %v2225 = vpack.c.b16 %v2203, %v2202
        %v2226 = vpack.c.b16 %v2205, %v2204
        %v2227 = vpack.c.b16 %v2207, %v2206
        %v2228 = vpack.c.b16 %v2209, %v2208
        %v2229 = vpack.c.b16 %v2211, %v2210
        %v2230 = vpack.c.b16 %v2213, %v2212
        %v2231 = vpack.c.b16 %v2215, %v2214
        %2232 = vrot.lane.b32.xlu0 %v2216, 8
        %v2233 = vpop.permute.xlu0 %2232
        %2234 = vrot.lane.b32.xlu0 %v2217, 8
        %v2235 = vpop.permute.xlu0 %2234
        %2236 = vrot.lane.b32.xlu0 %v2218, 8
        %v2237 = vpop.permute.xlu0 %2236
        %2238 = vrot.lane.b32.xlu0 %v2219, 8
        %v2239 = vpop.permute.xlu0 %2238
        %2240 = vrot.lane.b32.xlu0 %v2220, 8
        %v2241 = vpop.permute.xlu0 %2240
        %2242 = vrot.lane.b32.xlu0 %v2221, 8
        %v2243 = vpop.permute.xlu0 %2242
        %2244 = vrot.lane.b32.xlu0 %v2222, 8
        %v2245 = vpop.permute.xlu0 %2244
        %2246 = vrot.lane.b32.xlu0 %v2223, 8
        %v2247 = vpop.permute.xlu0 %2246
        %2248 = vrot.lane.b32.xlu0 %v2224, 8
        %v2249 = vpop.permute.xlu0 %2248
        %2250 = vrot.lane.b32.xlu0 %v2225, 8
        %v2251 = vpop.permute.xlu0 %2250
        %2252 = vrot.lane.b32.xlu0 %v2226, 8
        %v2253 = vpop.permute.xlu0 %2252
        %2254 = vrot.lane.b32.xlu0 %v2227, 8
        %v2255 = vpop.permute.xlu0 %2254
        %2256 = vrot.lane.b32.xlu0 %v2228, 8
        %v2257 = vpop.permute.xlu0 %2256
        %2258 = vrot.lane.b32.xlu0 %v2229, 8
        %v2259 = vpop.permute.xlu0 %2258
        %2260 = vrot.lane.b32.xlu0 %v2230, 8
        %v2261 = vpop.permute.xlu0 %2260
        %2262 = vrot.lane.b32.xlu0 %v2231, 8
        %v2263 = vpop.permute.xlu0 %2262
        %v2280 = vunpack.c.l.b16 %v823
        %v2281 = vunpack.c.l.b16 %v824
        %v2282 = vunpack.c.l.b16 %v825
        %v2283 = vunpack.c.l.b16 %v826
        %v2284 = vunpack.c.l.b16 %v827
        %v2285 = vunpack.c.l.b16 %v828
        %v2286 = vunpack.c.l.b16 %v829
        %v2287 = vunpack.c.l.b16 %v830
        %v2288 = vunpack.c.l.b16 %v831
        %v2289 = vunpack.c.l.b16 %v832
        %v2290 = vunpack.c.l.b16 %v833
        %v2291 = vunpack.c.l.b16 %v834
        %v2292 = vunpack.c.l.b16 %v835
        %v2293 = vunpack.c.l.b16 %v836
        %v2294 = vunpack.c.l.b16 %v837
        %v2295 = vunpack.c.l.b16 %v838
        %v2296 = vunpack.c.l.b16 %v839
        %v2297 = vunpack.c.l.b16 %v840
        %v2298 = vunpack.c.l.b16 %v841
        %v2299 = vunpack.c.l.b16 %v842
        %v2300 = vunpack.c.l.b16 %v843
        %v2301 = vunpack.c.l.b16 %v844
        %v2302 = vunpack.c.l.b16 %v845
        %v2303 = vunpack.c.l.b16 %v846
        %v2304 = vunpack.c.l.b16 %v847
        %v2305 = vunpack.c.l.b16 %v848
        %v2306 = vunpack.c.l.b16 %v849
        %v2307 = vunpack.c.l.b16 %v850
        %v2308 = vunpack.c.l.b16 %v851
        %v2309 = vunpack.c.l.b16 %v852
        %v2310 = vunpack.c.l.b16 %v853
        %v2311 = vunpack.c.l.b16 %v854
        %v2312 = vpack.c.b16 %v2281, %v2280
        %v2313 = vpack.c.b16 %v2283, %v2282
        %v2314 = vpack.c.b16 %v2285, %v2284
        %v2315 = vpack.c.b16 %v2287, %v2286
        %v2316 = vpack.c.b16 %v2289, %v2288
        %v2317 = vpack.c.b16 %v2291, %v2290
        %v2318 = vpack.c.b16 %v2293, %v2292
        %v2319 = vpack.c.b16 %v2295, %v2294
        %v2320 = vpack.c.b16 %v2297, %v2296
        %v2321 = vpack.c.b16 %v2299, %v2298
        %v2322 = vpack.c.b16 %v2301, %v2300
        %v2323 = vpack.c.b16 %v2303, %v2302
        %v2324 = vpack.c.b16 %v2305, %v2304
        %v2325 = vpack.c.b16 %v2307, %v2306
        %v2326 = vpack.c.b16 %v2309, %v2308
        %v2327 = vpack.c.b16 %v2311, %v2310
        %2328 = vrot.lane.b32.xlu0 %v2312, 12
        %v2329 = vpop.permute.xlu0 %2328
        %2330 = vrot.lane.b32.xlu0 %v2313, 12
        %v2331 = vpop.permute.xlu0 %2330
        %2332 = vrot.lane.b32.xlu0 %v2314, 12
        %v2333 = vpop.permute.xlu0 %2332
        %2334 = vrot.lane.b32.xlu0 %v2315, 12
        %v2335 = vpop.permute.xlu0 %2334
        %2336 = vrot.lane.b32.xlu0 %v2316, 12
        %v2337 = vpop.permute.xlu0 %2336
        %2338 = vrot.lane.b32.xlu0 %v2317, 12
        %v2339 = vpop.permute.xlu0 %2338
        %2340 = vrot.lane.b32.xlu0 %v2318, 12
        %v2341 = vpop.permute.xlu0 %2340
        %2342 = vrot.lane.b32.xlu0 %v2319, 12
        %v2343 = vpop.permute.xlu0 %2342
        %2344 = vrot.lane.b32.xlu0 %v2320, 12
        %v2345 = vpop.permute.xlu0 %2344
        %2346 = vrot.lane.b32.xlu0 %v2321, 12
        %v2347 = vpop.permute.xlu0 %2346
        %2348 = vrot.lane.b32.xlu0 %v2322, 12
        %v2349 = vpop.permute.xlu0 %2348
        %2350 = vrot.lane.b32.xlu0 %v2323, 12
        %v2351 = vpop.permute.xlu0 %2350
        %2352 = vrot.lane.b32.xlu0 %v2324, 12
        %v2353 = vpop.permute.xlu0 %2352
        %2354 = vrot.lane.b32.xlu0 %v2325, 12
        %v2355 = vpop.permute.xlu0 %2354
        %2356 = vrot.lane.b32.xlu0 %v2326, 12
        %v2357 = vpop.permute.xlu0 %2356
        %2358 = vrot.lane.b32.xlu0 %v2327, 12
        %v2359 = vpop.permute.xlu0 %2358
        %v2360 = vunpack.c.l.b16 %v884
        %v2361 = vunpack.c.l.b16 %v894
        %v2362 = vunpack.c.l.b16 %v908
        %v2363 = vunpack.c.l.b16 %v918
        %v2364 = vunpack.c.l.b16 %v932
        %v2365 = vunpack.c.l.b16 %v942
        %v2366 = vunpack.c.l.b16 %v956
        %v2367 = vunpack.c.l.b16 %v966
        %v2368 = vunpack.c.l.b16 %v980
        %v2369 = vunpack.c.l.b16 %v990
        %v2370 = vunpack.c.l.b16 %v1004
        %v2371 = vunpack.c.l.b16 %v1014
        %v2372 = vunpack.c.l.b16 %v1028
        %v2373 = vunpack.c.l.b16 %v1038
        %v2374 = vunpack.c.l.b16 %v1052
        %v2375 = vunpack.c.l.b16 %v1062
        %v2376 = vunpack.c.l.b16 %v1076
        %v2377 = vunpack.c.l.b16 %v1086
        %v2378 = vunpack.c.l.b16 %v1100
        %v2379 = vunpack.c.l.b16 %v1110
        %v2380 = vunpack.c.l.b16 %v1124
        %v2381 = vunpack.c.l.b16 %v1134
        %v2382 = vunpack.c.l.b16 %v1148
        %v2383 = vunpack.c.l.b16 %v1158
        %v2384 = vunpack.c.l.b16 %v1172
        %v2385 = vunpack.c.l.b16 %v1182
        %v2386 = vunpack.c.l.b16 %v1196
        %v2387 = vunpack.c.l.b16 %v1206
        %v2388 = vunpack.c.l.b16 %v1220
        %v2389 = vunpack.c.l.b16 %v1230
        %v2390 = vunpack.c.l.b16 %v1244
        %v2391 = vunpack.c.l.b16 %v1254
        %v2392 = vpack.c.b16 %v2361, %v2360
        %v2393 = vpack.c.b16 %v2363, %v2362
        %v2394 = vpack.c.b16 %v2365, %v2364
        %v2395 = vpack.c.b16 %v2367, %v2366
        %v2396 = vpack.c.b16 %v2369, %v2368
        %v2397 = vpack.c.b16 %v2371, %v2370
        %v2398 = vpack.c.b16 %v2373, %v2372
        %v2399 = vpack.c.b16 %v2375, %v2374
        %v2400 = vpack.c.b16 %v2377, %v2376
        %v2401 = vpack.c.b16 %v2379, %v2378
        %v2402 = vpack.c.b16 %v2381, %v2380
        %v2403 = vpack.c.b16 %v2383, %v2382
        %v2404 = vpack.c.b16 %v2385, %v2384
        %v2405 = vpack.c.b16 %v2387, %v2386
        %v2406 = vpack.c.b16 %v2389, %v2388
        %v2407 = vpack.c.b16 %v2391, %v2390
        %2408 = vrot.lane.b32.xlu0 %v2392, 16
        %v2409 = vpop.permute.xlu0 %2408
        %2410 = vrot.lane.b32.xlu0 %v2393, 16
        %v2411 = vpop.permute.xlu0 %2410
        %2412 = vrot.lane.b32.xlu0 %v2394, 16
        %v2413 = vpop.permute.xlu0 %2412
        %2414 = vrot.lane.b32.xlu0 %v2395, 16
        %v2415 = vpop.permute.xlu0 %2414
        %2416 = vrot.lane.b32.xlu0 %v2396, 16
        %v2417 = vpop.permute.xlu0 %2416
        %2418 = vrot.lane.b32.xlu0 %v2397, 16
        %v2419 = vpop.permute.xlu0 %2418
        %2420 = vrot.lane.b32.xlu0 %v2398, 16
        %v2421 = vpop.permute.xlu0 %2420
        %2422 = vrot.lane.b32.xlu0 %v2399, 16
        %v2423 = vpop.permute.xlu0 %2422
        %2424 = vrot.lane.b32.xlu0 %v2400, 16
        %v2425 = vpop.permute.xlu0 %2424
        %2426 = vrot.lane.b32.xlu0 %v2401, 16
        %v2427 = vpop.permute.xlu0 %2426
        %2428 = vrot.lane.b32.xlu0 %v2402, 16
        %v2429 = vpop.permute.xlu0 %2428
        %2430 = vrot.lane.b32.xlu0 %v2403, 16
        %v2431 = vpop.permute.xlu0 %2430
        %2432 = vrot.lane.b32.xlu0 %v2404, 16
        %v2433 = vpop.permute.xlu0 %2432
        %2434 = vrot.lane.b32.xlu0 %v2405, 16
        %v2435 = vpop.permute.xlu0 %2434
        %2436 = vrot.lane.b32.xlu0 %v2406, 16
        %v2437 = vpop.permute.xlu0 %2436
        %2438 = vrot.lane.b32.xlu0 %v2407, 16
        %v2439 = vpop.permute.xlu0 %2438
        %v2440 = vunpack.c.l.b16 %v1322
        %v2441 = vunpack.c.l.b16 %v1325
        %v2442 = vunpack.c.l.b16 %v1329
        %v2443 = vunpack.c.l.b16 %v1332
        %v2444 = vunpack.c.l.b16 %v1336
        %v2445 = vunpack.c.l.b16 %v1339
        %v2446 = vunpack.c.l.b16 %v1343
        %v2447 = vunpack.c.l.b16 %v1346
        %v2448 = vunpack.c.l.b16 %v1350
        %v2449 = vunpack.c.l.b16 %v1353
        %v2450 = vunpack.c.l.b16 %v1357
        %v2451 = vunpack.c.l.b16 %v1360
        %v2452 = vunpack.c.l.b16 %v1364
        %v2453 = vunpack.c.l.b16 %v1367
        %v2454 = vunpack.c.l.b16 %v1371
        %v2455 = vunpack.c.l.b16 %v1374
        %v2456 = vunpack.c.l.b16 %v1378
        %v2457 = vunpack.c.l.b16 %v1381
        %v2458 = vunpack.c.l.b16 %v1385
        %v2459 = vunpack.c.l.b16 %v1388
        %v2460 = vunpack.c.l.b16 %v1392
        %v2461 = vunpack.c.l.b16 %v1395
        %v2462 = vunpack.c.l.b16 %v1399
        %v2463 = vunpack.c.l.b16 %v1402
        %v2464 = vunpack.c.l.b16 %v1406
        %v2465 = vunpack.c.l.b16 %v1409
        %v2466 = vunpack.c.l.b16 %v1413
        %v2467 = vunpack.c.l.b16 %v1416
        %v2468 = vunpack.c.l.b16 %v1420
        %v2469 = vunpack.c.l.b16 %v1423
        %v2470 = vunpack.c.l.b16 %v1427
        %v2471 = vunpack.c.l.b16 %v1430
        %v2472 = vpack.c.b16 %v2441, %v2440
        %v2473 = vpack.c.b16 %v2443, %v2442
        %v2474 = vpack.c.b16 %v2445, %v2444
        %v2475 = vpack.c.b16 %v2447, %v2446
        %v2476 = vpack.c.b16 %v2449, %v2448
        %v2477 = vpack.c.b16 %v2451, %v2450
        %v2478 = vpack.c.b16 %v2453, %v2452
        %v2479 = vpack.c.b16 %v2455, %v2454
        %v2480 = vpack.c.b16 %v2457, %v2456
        %v2481 = vpack.c.b16 %v2459, %v2458
        %v2482 = vpack.c.b16 %v2461, %v2460
        %v2483 = vpack.c.b16 %v2463, %v2462
        %v2484 = vpack.c.b16 %v2465, %v2464
        %v2485 = vpack.c.b16 %v2467, %v2466
        %v2486 = vpack.c.b16 %v2469, %v2468
        %v2487 = vpack.c.b16 %v2471, %v2470
        %2488 = vrot.lane.b32.xlu0 %v2472, 20
        %v2489 = vpop.permute.xlu0 %2488
        %2490 = vrot.lane.b32.xlu0 %v2473, 20
        %v2491 = vpop.permute.xlu0 %2490
        %2492 = vrot.lane.b32.xlu0 %v2474, 20
        %v2493 = vpop.permute.xlu0 %2492
        %2494 = vrot.lane.b32.xlu0 %v2475, 20
        %v2495 = vpop.permute.xlu0 %2494
        %2496 = vrot.lane.b32.xlu0 %v2476, 20
        %v2497 = vpop.permute.xlu0 %2496
        %2498 = vrot.lane.b32.xlu0 %v2477, 20
        %v2499 = vpop.permute.xlu0 %2498
        %2500 = vrot.lane.b32.xlu0 %v2478, 20
        %v2501 = vpop.permute.xlu0 %2500
        %2502 = vrot.lane.b32.xlu0 %v2479, 20
        %v2503 = vpop.permute.xlu0 %2502
        %2504 = vrot.lane.b32.xlu0 %v2480, 20
        %v2505 = vpop.permute.xlu0 %2504
        %2506 = vrot.lane.b32.xlu0 %v2481, 20
        %v2507 = vpop.permute.xlu0 %2506
        %2508 = vrot.lane.b32.xlu0 %v2482, 20
        %v2509 = vpop.permute.xlu0 %2508
        %2510 = vrot.lane.b32.xlu0 %v2483, 20
        %v2511 = vpop.permute.xlu0 %2510
        %2512 = vrot.lane.b32.xlu0 %v2484, 20
        %v2513 = vpop.permute.xlu0 %2512
        %2514 = vrot.lane.b32.xlu0 %v2485, 20
        %v2515 = vpop.permute.xlu0 %2514
        %2516 = vrot.lane.b32.xlu0 %v2486, 20
        %v2517 = vpop.permute.xlu0 %2516
        %2518 = vrot.lane.b32.xlu0 %v2487, 20
        %v2519 = vpop.permute.xlu0 %2518
        %v2536 = vunpack.c.l.b16 %v1432
        %v2537 = vunpack.c.l.b16 %v1433
        %v2538 = vunpack.c.l.b16 %v1434
        %v2539 = vunpack.c.l.b16 %v1435
        %v2540 = vunpack.c.l.b16 %v1436
        %v2541 = vunpack.c.l.b16 %v1437
        %v2542 = vunpack.c.l.b16 %v1438
        %v2543 = vunpack.c.l.b16 %v1439
        %v2544 = vunpack.c.l.b16 %v1440
        %v2545 = vunpack.c.l.b16 %v1441
        %v2546 = vunpack.c.l.b16 %v1442
        %v2547 = vunpack.c.l.b16 %v1443
        %v2548 = vunpack.c.l.b16 %v1444
        %v2549 = vunpack.c.l.b16 %v1445
        %v2550 = vunpack.c.l.b16 %v1446
        %v2551 = vunpack.c.l.b16 %v1447
        %v2552 = vunpack.c.l.b16 %v1448
        %v2553 = vunpack.c.l.b16 %v1449
        %v2554 = vunpack.c.l.b16 %v1450
        %v2555 = vunpack.c.l.b16 %v1451
        %v2556 = vunpack.c.l.b16 %v1452
        %v2557 = vunpack.c.l.b16 %v1453
        %v2558 = vunpack.c.l.b16 %v1454
        %v2559 = vunpack.c.l.b16 %v1455
        %v2560 = vunpack.c.l.b16 %v1456
        %v2561 = vunpack.c.l.b16 %v1457
        %v2562 = vunpack.c.l.b16 %v1458
        %v2563 = vunpack.c.l.b16 %v1459
        %v2564 = vunpack.c.l.b16 %v1460
        %v2565 = vunpack.c.l.b16 %v1461
        %v2566 = vunpack.c.l.b16 %v1462
        %v2567 = vunpack.c.l.b16 %v1463
        %v2568 = vpack.c.b16 %v2537, %v2536
        %v2569 = vpack.c.b16 %v2539, %v2538
        %v2570 = vpack.c.b16 %v2541, %v2540
        %v2571 = vpack.c.b16 %v2543, %v2542
        %v2572 = vpack.c.b16 %v2545, %v2544
        %v2573 = vpack.c.b16 %v2547, %v2546
        %v2574 = vpack.c.b16 %v2549, %v2548
        %v2575 = vpack.c.b16 %v2551, %v2550
        %v2576 = vpack.c.b16 %v2553, %v2552
        %v2577 = vpack.c.b16 %v2555, %v2554
        %v2578 = vpack.c.b16 %v2557, %v2556
        %v2579 = vpack.c.b16 %v2559, %v2558
        %v2580 = vpack.c.b16 %v2561, %v2560
        %v2581 = vpack.c.b16 %v2563, %v2562
        %v2582 = vpack.c.b16 %v2565, %v2564
        %v2583 = vpack.c.b16 %v2567, %v2566
        %2584 = vrot.lane.b32.xlu0 %v2568, 24
        %v2585 = vpop.permute.xlu0 %2584
        %2586 = vrot.lane.b32.xlu0 %v2569, 24
        %v2587 = vpop.permute.xlu0 %2586
        %2588 = vrot.lane.b32.xlu0 %v2570, 24
        %v2589 = vpop.permute.xlu0 %2588
        %2590 = vrot.lane.b32.xlu0 %v2571, 24
        %v2591 = vpop.permute.xlu0 %2590
        %2592 = vrot.lane.b32.xlu0 %v2572, 24
        %v2593 = vpop.permute.xlu0 %2592
        %2594 = vrot.lane.b32.xlu0 %v2573, 24
        %v2595 = vpop.permute.xlu0 %2594
        %2596 = vrot.lane.b32.xlu0 %v2574, 24
        %v2597 = vpop.permute.xlu0 %2596
        %2598 = vrot.lane.b32.xlu0 %v2575, 24
        %v2599 = vpop.permute.xlu0 %2598
        %2600 = vrot.lane.b32.xlu0 %v2576, 24
        %v2601 = vpop.permute.xlu0 %2600
        %2602 = vrot.lane.b32.xlu0 %v2577, 24
        %v2603 = vpop.permute.xlu0 %2602
        %2604 = vrot.lane.b32.xlu0 %v2578, 24
        %v2605 = vpop.permute.xlu0 %2604
        %2606 = vrot.lane.b32.xlu0 %v2579, 24
        %v2607 = vpop.permute.xlu0 %2606
        %2608 = vrot.lane.b32.xlu0 %v2580, 24
        %v2609 = vpop.permute.xlu0 %2608
        %2610 = vrot.lane.b32.xlu0 %v2581, 24
        %v2611 = vpop.permute.xlu0 %2610
        %2612 = vrot.lane.b32.xlu0 %v2582, 24
        %v2613 = vpop.permute.xlu0 %2612
        %2614 = vrot.lane.b32.xlu0 %v2583, 24
        %v2615 = vpop.permute.xlu0 %2614
        %v2616 = vunpack.c.l.b16 %v1493
        %v2617 = vunpack.c.l.b16 %v1503
        %v2618 = vunpack.c.l.b16 %v1517
        %v2619 = vunpack.c.l.b16 %v1527
        %v2620 = vunpack.c.l.b16 %v1541
        %v2621 = vunpack.c.l.b16 %v1551
        %v2622 = vunpack.c.l.b16 %v1565
        %v2623 = vunpack.c.l.b16 %v1575
        %v2624 = vunpack.c.l.b16 %v1589
        %v2625 = vunpack.c.l.b16 %v1599
        %v2626 = vunpack.c.l.b16 %v1613
        %v2627 = vunpack.c.l.b16 %v1623
        %v2628 = vunpack.c.l.b16 %v1637
        %v2629 = vunpack.c.l.b16 %v1647
        %v2630 = vunpack.c.l.b16 %v1661
        %v2631 = vunpack.c.l.b16 %v1671
        %v2632 = vunpack.c.l.b16 %v1685
        %v2633 = vunpack.c.l.b16 %v1695
        %v2634 = vunpack.c.l.b16 %v1709
        %v2635 = vunpack.c.l.b16 %v1719
        %v2636 = vunpack.c.l.b16 %v1733
        %v2637 = vunpack.c.l.b16 %v1743
        %v2638 = vunpack.c.l.b16 %v1757
        %v2639 = vunpack.c.l.b16 %v1767
        %v2640 = vunpack.c.l.b16 %v1781
        %v2641 = vunpack.c.l.b16 %v1791
        %v2642 = vunpack.c.l.b16 %v1805
        %v2643 = vunpack.c.l.b16 %v1815
        %v2644 = vunpack.c.l.b16 %v1829
        %v2645 = vunpack.c.l.b16 %v1839
        %v2646 = vunpack.c.l.b16 %v1853
        %v2647 = vunpack.c.l.b16 %v1863
        %v2648 = vpack.c.b16 %v2617, %v2616
        %v2649 = vpack.c.b16 %v2619, %v2618
        %v2650 = vpack.c.b16 %v2621, %v2620
        %v2651 = vpack.c.b16 %v2623, %v2622
        %v2652 = vpack.c.b16 %v2625, %v2624
        %v2653 = vpack.c.b16 %v2627, %v2626
        %v2654 = vpack.c.b16 %v2629, %v2628
        %v2655 = vpack.c.b16 %v2631, %v2630
        %v2656 = vpack.c.b16 %v2633, %v2632
        %v2657 = vpack.c.b16 %v2635, %v2634
        %v2658 = vpack.c.b16 %v2637, %v2636
        %v2659 = vpack.c.b16 %v2639, %v2638
        %v2660 = vpack.c.b16 %v2641, %v2640
        %v2661 = vpack.c.b16 %v2643, %v2642
        %v2662 = vpack.c.b16 %v2645, %v2644
        %v2663 = vpack.c.b16 %v2647, %v2646
        %2664 = vrot.lane.b32.xlu0 %v2648, 28
        %v2665 = vpop.permute.xlu0 %2664
        %2666 = vrot.lane.b32.xlu0 %v2649, 28
        %v2667 = vpop.permute.xlu0 %2666
        %2668 = vrot.lane.b32.xlu0 %v2650, 28
        %v2669 = vpop.permute.xlu0 %2668
        %2670 = vrot.lane.b32.xlu0 %v2651, 28
        %v2671 = vpop.permute.xlu0 %2670
        %2672 = vrot.lane.b32.xlu0 %v2652, 28
        %v2673 = vpop.permute.xlu0 %2672
        %2674 = vrot.lane.b32.xlu0 %v2653, 28
        %v2675 = vpop.permute.xlu0 %2674
        %2676 = vrot.lane.b32.xlu0 %v2654, 28
        %v2677 = vpop.permute.xlu0 %2676
        %2678 = vrot.lane.b32.xlu0 %v2655, 28
        %v2679 = vpop.permute.xlu0 %2678
        %2680 = vrot.lane.b32.xlu0 %v2656, 28
        %v2681 = vpop.permute.xlu0 %2680
        %2682 = vrot.lane.b32.xlu0 %v2657, 28
        %v2683 = vpop.permute.xlu0 %2682
        %2684 = vrot.lane.b32.xlu0 %v2658, 28
        %v2685 = vpop.permute.xlu0 %2684
        %2686 = vrot.lane.b32.xlu0 %v2659, 28
        %v2687 = vpop.permute.xlu0 %2686
        %2688 = vrot.lane.b32.xlu0 %v2660, 28
        %v2689 = vpop.permute.xlu0 %2688
        %2690 = vrot.lane.b32.xlu0 %v2661, 28
        %v2691 = vpop.permute.xlu0 %2690
        %2692 = vrot.lane.b32.xlu0 %v2662, 28
        %v2693 = vpop.permute.xlu0 %2692
        %2694 = vrot.lane.b32.xlu0 %v2663, 28
        %v2695 = vpop.permute.xlu0 %2694
        %v2696 = vunpack.c.l.b16 %v1931
        %v2697 = vunpack.c.l.b16 %v1934
        %v2698 = vunpack.c.l.b16 %v1938
        %v2699 = vunpack.c.l.b16 %v1941
        %v2700 = vunpack.c.l.b16 %v1945
        %v2701 = vunpack.c.l.b16 %v1948
        %v2702 = vunpack.c.l.b16 %v1952
        %v2703 = vunpack.c.l.b16 %v1955
        %v2704 = vunpack.c.l.b16 %v1959
        %v2705 = vunpack.c.l.b16 %v1962
        %v2706 = vunpack.c.l.b16 %v1966
        %v2707 = vunpack.c.l.b16 %v1969
        %v2708 = vunpack.c.l.b16 %v1973
        %v2709 = vunpack.c.l.b16 %v1976
        %v2710 = vunpack.c.l.b16 %v1980
        %v2711 = vunpack.c.l.b16 %v1983
        %v2712 = vunpack.c.l.b16 %v1987
        %v2713 = vunpack.c.l.b16 %v1990
        %v2714 = vunpack.c.l.b16 %v1994
        %v2715 = vunpack.c.l.b16 %v1997
        %v2716 = vunpack.c.l.b16 %v2001
        %v2717 = vunpack.c.l.b16 %v2004
        %v2718 = vunpack.c.l.b16 %v2008
        %v2719 = vunpack.c.l.b16 %v2011
        %v2720 = vunpack.c.l.b16 %v2015
        %v2721 = vunpack.c.l.b16 %v2018
        %v2722 = vunpack.c.l.b16 %v2022
        %v2723 = vunpack.c.l.b16 %v2025
        %v2724 = vunpack.c.l.b16 %v2029
        %v2725 = vunpack.c.l.b16 %v2032
        %v2726 = vunpack.c.l.b16 %v2036
        %v2727 = vunpack.c.l.b16 %v2039
        %v2728 = vpack.c.b16 %v2697, %v2696
        %v2729 = vpack.c.b16 %v2699, %v2698
        %v2730 = vpack.c.b16 %v2701, %v2700
        %v2731 = vpack.c.b16 %v2703, %v2702
        %v2732 = vpack.c.b16 %v2705, %v2704
        %v2733 = vpack.c.b16 %v2707, %v2706
        %v2734 = vpack.c.b16 %v2709, %v2708
        %v2735 = vpack.c.b16 %v2711, %v2710
        %v2736 = vpack.c.b16 %v2713, %v2712
        %v2737 = vpack.c.b16 %v2715, %v2714
        %v2738 = vpack.c.b16 %v2717, %v2716
        %v2739 = vpack.c.b16 %v2719, %v2718
        %v2740 = vpack.c.b16 %v2721, %v2720
        %v2741 = vpack.c.b16 %v2723, %v2722
        %v2742 = vpack.c.b16 %v2725, %v2724
        %v2743 = vpack.c.b16 %v2727, %v2726
        %2744 = vrot.lane.b32.xlu0 %v2728, 32
        %v2745 = vpop.permute.xlu0 %2744
        %2746 = vrot.lane.b32.xlu0 %v2729, 32
        %v2747 = vpop.permute.xlu0 %2746
        %2748 = vrot.lane.b32.xlu0 %v2730, 32
        %v2749 = vpop.permute.xlu0 %2748
        %2750 = vrot.lane.b32.xlu0 %v2731, 32
        %v2751 = vpop.permute.xlu0 %2750
        %2752 = vrot.lane.b32.xlu0 %v2732, 32
        %v2753 = vpop.permute.xlu0 %2752
        %2754 = vrot.lane.b32.xlu0 %v2733, 32
        %v2755 = vpop.permute.xlu0 %2754
        %2756 = vrot.lane.b32.xlu0 %v2734, 32
        %v2757 = vpop.permute.xlu0 %2756
        %2758 = vrot.lane.b32.xlu0 %v2735, 32
        %v2759 = vpop.permute.xlu0 %2758
        %2760 = vrot.lane.b32.xlu0 %v2736, 32
        %v2761 = vpop.permute.xlu0 %2760
        %2762 = vrot.lane.b32.xlu0 %v2737, 32
        %v2763 = vpop.permute.xlu0 %2762
        %2764 = vrot.lane.b32.xlu0 %v2738, 32
        %v2765 = vpop.permute.xlu0 %2764
        %2766 = vrot.lane.b32.xlu0 %v2739, 32
        %v2767 = vpop.permute.xlu0 %2766
        %2768 = vrot.lane.b32.xlu0 %v2740, 32
        %v2769 = vpop.permute.xlu0 %2768
        %2770 = vrot.lane.b32.xlu0 %v2741, 32
        %v2771 = vpop.permute.xlu0 %2770
        %2772 = vrot.lane.b32.xlu0 %v2742, 32
        %v2773 = vpop.permute.xlu0 %2772
        %2774 = vrot.lane.b32.xlu0 %v2743, 32
        %v2775 = vpop.permute.xlu0 %2774
        %vm2776 = vcmask 31744
        %v2779 = vsel %vm2776, %v2088, %v2153
        %v2782 = vsel %vm2776, %v2089, %v2155
        %v2785 = vsel %vm2776, %v2090, %v2157
        %v2788 = vsel %vm2776, %v2091, %v2159
        %v2791 = vsel %vm2776, %v2092, %v2161
        %v2794 = vsel %vm2776, %v2093, %v2163
        %v2797 = vsel %vm2776, %v2094, %v2165
        %v2800 = vsel %vm2776, %v2095, %v2167
        %v2803 = vsel %vm2776, %v2096, %v2169
        %v2806 = vsel %vm2776, %v2097, %v2171
        %v2809 = vsel %vm2776, %v2098, %v2173
        %v2812 = vsel %vm2776, %v2099, %v2175
        %v2815 = vsel %vm2776, %v2100, %v2177
        %v2818 = vsel %vm2776, %v2101, %v2179
        %v2821 = vsel %vm2776, %v2102, %v2181
        %v2824 = vsel %vm2776, %v2103, %v2183
        %vm2825 = vcmask 64512
        %v2827 = vsel %vm2825, %v2779, %v2233
        %v2829 = vsel %vm2825, %v2782, %v2235
        %v2831 = vsel %vm2825, %v2785, %v2237
        %v2833 = vsel %vm2825, %v2788, %v2239
        %v2835 = vsel %vm2825, %v2791, %v2241
        %v2837 = vsel %vm2825, %v2794, %v2243
        %v2839 = vsel %vm2825, %v2797, %v2245
        %v2841 = vsel %vm2825, %v2800, %v2247
        %v2843 = vsel %vm2825, %v2803, %v2249
        %v2845 = vsel %vm2825, %v2806, %v2251
        %v2847 = vsel %vm2825, %v2809, %v2253
        %v2849 = vsel %vm2825, %v2812, %v2255
        %v2851 = vsel %vm2825, %v2815, %v2257
        %v2853 = vsel %vm2825, %v2818, %v2259
        %v2855 = vsel %vm2825, %v2821, %v2261
        %v2857 = vsel %vm2825, %v2824, %v2263
        %vm2858 = vcmask 97280
        %v2860 = vsel %vm2858, %v2827, %v2329
        %v2862 = vsel %vm2858, %v2829, %v2331
        %v2864 = vsel %vm2858, %v2831, %v2333
        %v2866 = vsel %vm2858, %v2833, %v2335
        %v2868 = vsel %vm2858, %v2835, %v2337
        %v2870 = vsel %vm2858, %v2837, %v2339
        %v2872 = vsel %vm2858, %v2839, %v2341
        %v2874 = vsel %vm2858, %v2841, %v2343
        %v2876 = vsel %vm2858, %v2843, %v2345
        %v2878 = vsel %vm2858, %v2845, %v2347
        %v2880 = vsel %vm2858, %v2847, %v2349
        %v2882 = vsel %vm2858, %v2849, %v2351
        %v2884 = vsel %vm2858, %v2851, %v2353
        %v2886 = vsel %vm2858, %v2853, %v2355
        %v2888 = vsel %vm2858, %v2855, %v2357
        %v2890 = vsel %vm2858, %v2857, %v2359
        %vm2891 = vcmask 130048
        %v2893 = vsel %vm2891, %v2860, %v2409
        %v2895 = vsel %vm2891, %v2862, %v2411
        %v2897 = vsel %vm2891, %v2864, %v2413
        %v2899 = vsel %vm2891, %v2866, %v2415
        %v2901 = vsel %vm2891, %v2868, %v2417
        %v2903 = vsel %vm2891, %v2870, %v2419
        %v2905 = vsel %vm2891, %v2872, %v2421
        %v2907 = vsel %vm2891, %v2874, %v2423
        %v2909 = vsel %vm2891, %v2876, %v2425
        %v2911 = vsel %vm2891, %v2878, %v2427
        %v2913 = vsel %vm2891, %v2880, %v2429
        %v2915 = vsel %vm2891, %v2882, %v2431
        %v2917 = vsel %vm2891, %v2884, %v2433
        %v2919 = vsel %vm2891, %v2886, %v2435
        %v2921 = vsel %vm2891, %v2888, %v2437
        %v2923 = vsel %vm2891, %v2890, %v2439
        %vm2924 = vcmask 162816
        %v2926 = vsel %vm2924, %v2893, %v2489
        %v2928 = vsel %vm2924, %v2895, %v2491
        %v2930 = vsel %vm2924, %v2897, %v2493
        %v2932 = vsel %vm2924, %v2899, %v2495
        %v2934 = vsel %vm2924, %v2901, %v2497
        %v2936 = vsel %vm2924, %v2903, %v2499
        %v2938 = vsel %vm2924, %v2905, %v2501
        %v2940 = vsel %vm2924, %v2907, %v2503
        %v2942 = vsel %vm2924, %v2909, %v2505
        %v2944 = vsel %vm2924, %v2911, %v2507
        %v2946 = vsel %vm2924, %v2913, %v2509
        %v2948 = vsel %vm2924, %v2915, %v2511
        %v2950 = vsel %vm2924, %v2917, %v2513
        %v2952 = vsel %vm2924, %v2919, %v2515
        %v2954 = vsel %vm2924, %v2921, %v2517
        %v2956 = vsel %vm2924, %v2923, %v2519
        %vm2957 = vcmask 195584
        %v2959 = vsel %vm2957, %v2926, %v2585
        %v2961 = vsel %vm2957, %v2928, %v2587
        %v2963 = vsel %vm2957, %v2930, %v2589
        %v2965 = vsel %vm2957, %v2932, %v2591
        %v2967 = vsel %vm2957, %v2934, %v2593
        %v2969 = vsel %vm2957, %v2936, %v2595
        %v2971 = vsel %vm2957, %v2938, %v2597
        %v2973 = vsel %vm2957, %v2940, %v2599
        %v2975 = vsel %vm2957, %v2942, %v2601
        %v2977 = vsel %vm2957, %v2944, %v2603
        %v2979 = vsel %vm2957, %v2946, %v2605
        %v2981 = vsel %vm2957, %v2948, %v2607
        %v2983 = vsel %vm2957, %v2950, %v2609
        %v2985 = vsel %vm2957, %v2952, %v2611
        %v2987 = vsel %vm2957, %v2954, %v2613
        %v2989 = vsel %vm2957, %v2956, %v2615
        %vm2990 = vcmask 228352
        %v2992 = vsel %vm2990, %v2959, %v2665
        %v2994 = vsel %vm2990, %v2961, %v2667
        %v2996 = vsel %vm2990, %v2963, %v2669
        %v2998 = vsel %vm2990, %v2965, %v2671
        %v3000 = vsel %vm2990, %v2967, %v2673
        %v3002 = vsel %vm2990, %v2969, %v2675
        %v3004 = vsel %vm2990, %v2971, %v2677
        %v3006 = vsel %vm2990, %v2973, %v2679
        %v3008 = vsel %vm2990, %v2975, %v2681
        %v3010 = vsel %vm2990, %v2977, %v2683
        %v3012 = vsel %vm2990, %v2979, %v2685
        %v3014 = vsel %vm2990, %v2981, %v2687
        %v3016 = vsel %vm2990, %v2983, %v2689
        %v3018 = vsel %vm2990, %v2985, %v2691
        %v3020 = vsel %vm2990, %v2987, %v2693
        %v3022 = vsel %vm2990, %v2989, %v2695
        %vm3023 = vcmask 261120
        %v3025 = vsel %vm3023, %v2992, %v2745
        %v3027 = vsel %vm3023, %v2994, %v2747
        %v3029 = vsel %vm3023, %v2996, %v2749
        %v3031 = vsel %vm3023, %v2998, %v2751
        %v3033 = vsel %vm3023, %v3000, %v2753
        %v3035 = vsel %vm3023, %v3002, %v2755
        %v3037 = vsel %vm3023, %v3004, %v2757
        %v3039 = vsel %vm3023, %v3006, %v2759
        %v3041 = vsel %vm3023, %v3008, %v2761
        %v3043 = vsel %vm3023, %v3010, %v2763
        %v3045 = vsel %vm3023, %v3012, %v2765
        %v3047 = vsel %vm3023, %v3014, %v2767
        %v3049 = vsel %vm3023, %v3016, %v2769
        %v3051 = vsel %vm3023, %v3018, %v2771
        %v3053 = vsel %vm3023, %v3020, %v2773
        %v3055 = vsel %vm3023, %v3022, %v2775
        %v3056 = vld [vmem:[%s1] sm:$0xf]
        %v3057 = vld [vmem:[%s1 + $0x4] sm:$0xf]
        %v3058 = vld [vmem:[%s1 + $0x8] sm:$0xf]
        %v3059 = vld [vmem:[%s1 + $0xc] sm:$0xf]
        %v3060 = vld [vmem:[%s1 + $0x10] sm:$0x3]
        %v3061 = vld [vmem:[%s2] sm:$0x1]
        %v3063 = vlaneseq
        %v3064 = vshrl.u32 %v3063, 7
        %v3065 = vsub.s32 0, %v3064
        %v3066 = vrot.slane %v3061, %v3065
        %v3073 = vunpack.c.l.b16 %v3056
        %v3074 = vunpack.c.l.b16 %v3057
        %v3075 = vunpack.c.l.b16 %v3058
        %v3076 = vunpack.c.l.b16 %v3059
        %v3077 = vunpack.c.l.b16 %v3060
        %v3078 = vpack.c.b16 %v3074, %v3073
        %v3079 = vpack.c.b16 %v3076, %v3075
        %v3080 = vpack.c.b16 %v3077, %v3077
        %vm3083 = vcmask 293888
        %v3084 = vsel %vm3083, %v3025, 0
        %v3086 = vsel %vm3083, %v3027, 0
        %v3088 = vsel %vm3083, %v3029, 0
        %v3090 = vsel %vm3083, %v3031, 0
        %v3092 = vsel %vm3083, %v3033, 0
        %v3094 = vsel %vm3083, %v3035, 0
        %v3096 = vsel %vm3083, %v3037, 0
        %v3098 = vsel %vm3083, %v3039, 0
        %v3100 = vsel %vm3083, %v3041, 0
        %v3102 = vsel %vm3083, %v3043, 0
        %v3104 = vsel %vm3083, %v3045, 0
        %v3106 = vsel %vm3083, %v3047, 0
        %v3108 = vsel %vm3083, %v3049, 0
        %v3110 = vsel %vm3083, %v3051, 0
        %v3112 = vsel %vm3083, %v3053, 0
        %v3114 = vsel %vm3083, %v3055, 0
        %vm3116 = vcmask 1041408
        %v3118 = vsel %vm3116, %v3080, 0
        %3120 = vmatprep.subr.bf16.mxu0 0
        %3121 = vmatpush1.bf16.msra.mxu0 %v3078
        %3122 = vmatprep.subr.bf16.mxu0 0
        %3123 = vmatpush1.bf16.msra.mxu0 %v3079
        %3124 = vmatprep.subr.bf16.mxu0 0
        %3125 = vmatpush1.bf16.msra.mxu0 %v3118
        %3126 = vmatprep.subr.bf16.mxu0 0
        %3127 = vmatpush1.bf16.msra.mxu0 0
        %3128 = vmatprep.subr.bf16.mxu0 0
        %3129 = vmatpush1.bf16.msra.mxu0 0
        %3130 = vmatprep.subr.bf16.mxu0 0
        %3131 = vmatpush1.bf16.msra.mxu0 0
        %3132 = vmatprep.subr.bf16.mxu0 0
        %3133 = vmatpush1.bf16.msra.mxu0 0
        %3134 = vmatprep.subr.bf16.mxu0 0
        %3135 = vmatpush1.bf16.msra.mxu0 0
        %3136 = vmatprep.subr.bf16.mxu0 0
        %3137 = vmatpush1.bf16.msra.mxu0 0
        %3138 = vmatprep.subr.bf16.mxu0 0
        %3139 = vmatpush1.bf16.msra.mxu0 0
        %3140 = vmatprep.subr.bf16.mxu0 0
        %3141 = vmatpush1.bf16.msra.mxu0 0
        %3142 = vmatprep.subr.bf16.mxu0 0
        %3143 = vmatpush1.bf16.msra.mxu0 0
        %3144 = vmatprep.subr.bf16.mxu0 0
        %3145 = vmatpush1.bf16.msra.mxu0 0
        %3146 = vmatprep.subr.bf16.mxu0 0
        %3147 = vmatpush1.bf16.msra.mxu0 0
        %3148 = vmatprep.subr.bf16.mxu0 0
        %3149 = vmatpush1.bf16.msra.mxu0 0
        %3150 = vmatprep.subr.bf16.mxu0 0
        %3151 = vmatpush1.bf16.msra.mxu0 0
        %3152 = vmatprep.mubr.bf16.mxu0 0
        %3153 = vmatmul.mubr.bf16.gmra.mrb[0].mxu0 %v3084
        %v3154 = vpop.f32.mrb[0].mxu0
        %v3155 = vadd.f32 %v3066, %v3154
        %v3156 = vpop.f32.mrb[0].mxu0
        %v3157 = vpop.f32.mrb[0].mxu0
        %v3158 = vadd.f32 %v3066, %v3157
        %v3159 = vpop.f32.mrb[0].mxu0
        %3160 = vmatprep.mubr.bf16.mxu0 0
        %3161 = vmatmul.mubr.bf16.gmra.mrb[0].mxu0 %v3086
        %v3162 = vpop.f32.mrb[0].mxu0
        %v3163 = vadd.f32 %v3066, %v3162
        %v3164 = vpop.f32.mrb[0].mxu0
        %v3165 = vpop.f32.mrb[0].mxu0
        %v3166 = vadd.f32 %v3066, %v3165
        %v3167 = vpop.f32.mrb[0].mxu0
        %3168 = vmatprep.mubr.bf16.mxu0 0
        %3169 = vmatmul.mubr.bf16.gmra.mrb[0].mxu0 %v3088
        %v3170 = vpop.f32.mrb[0].mxu0
        %v3171 = vadd.f32 %v3066, %v3170
        %v3172 = vpop.f32.mrb[0].mxu0
        %v3173 = vpop.f32.mrb[0].mxu0
        %v3174 = vadd.f32 %v3066, %v3173
        %v3175 = vpop.f32.mrb[0].mxu0
        %3176 = vmatprep.mubr.bf16.mxu0 0
        %3177 = vmatmul.mubr.bf16.gmra.mrb[0].mxu0 %v3090
        %v3178 = vpop.f32.mrb[0].mxu0
        %v3179 = vadd.f32 %v3066, %v3178
        %v3180 = vpop.f32.mrb[0].mxu0
        %v3181 = vpop.f32.mrb[0].mxu0
        %v3182 = vadd.f32 %v3066, %v3181
        %v3183 = vpop.f32.mrb[0].mxu0
        %3184 = vmatprep.mubr.bf16.mxu0 0
        %3185 = vmatmul.mubr.bf16.gmra.mrb[0].mxu0 %v3092
        %v3186 = vpop.f32.mrb[0].mxu0
        %v3187 = vadd.f32 %v3066, %v3186
        %v3188 = vpop.f32.mrb[0].mxu0
        %v3189 = vpop.f32.mrb[0].mxu0
        %v3190 = vadd.f32 %v3066, %v3189
        %v3191 = vpop.f32.mrb[0].mxu0
        %3192 = vmatprep.mubr.bf16.mxu0 0
        %3193 = vmatmul.mubr.bf16.gmra.mrb[0].mxu0 %v3094
        %v3194 = vpop.f32.mrb[0].mxu0
        %v3195 = vadd.f32 %v3066, %v3194
        %v3196 = vpop.f32.mrb[0].mxu0
        %v3197 = vpop.f32.mrb[0].mxu0
        %v3198 = vadd.f32 %v3066, %v3197
        %v3199 = vpop.f32.mrb[0].mxu0
        %3200 = vmatprep.mubr.bf16.mxu0 0
        %3201 = vmatmul.mubr.bf16.gmra.mrb[0].mxu0 %v3096
        %v3202 = vpop.f32.mrb[0].mxu0
        %v3203 = vadd.f32 %v3066, %v3202
        %v3204 = vpop.f32.mrb[0].mxu0
        %v3205 = vpop.f32.mrb[0].mxu0
        %v3206 = vadd.f32 %v3066, %v3205
        %v3207 = vpop.f32.mrb[0].mxu0
        %3208 = vmatprep.mubr.bf16.mxu0 0
        %3209 = vmatmul.mubr.bf16.gmra.mrb[0].mxu0 %v3098
        %v3210 = vpop.f32.mrb[0].mxu0
        %v3211 = vadd.f32 %v3066, %v3210
        %v3212 = vpop.f32.mrb[0].mxu0
        %v3213 = vpop.f32.mrb[0].mxu0
        %v3214 = vadd.f32 %v3066, %v3213
        %v3215 = vpop.f32.mrb[0].mxu0
        %3216 = vmatprep.mubr.bf16.mxu0 0
        %3217 = vmatmul.mubr.bf16.gmra.mrb[0].mxu0 %v3100
        %v3218 = vpop.f32.mrb[0].mxu0
        %v3219 = vadd.f32 %v3066, %v3218
        %v3220 = vpop.f32.mrb[0].mxu0
        %v3221 = vpop.f32.mrb[0].mxu0
        %v3222 = vadd.f32 %v3066, %v3221
        %v3223 = vpop.f32.mrb[0].mxu0
        %3224 = vmatprep.mubr.bf16.mxu0 0
        %3225 = vmatmul.mubr.bf16.gmra.mrb[0].mxu0 %v3102
        %v3226 = vpop.f32.mrb[0].mxu0
        %v3227 = vadd.f32 %v3066, %v3226
        %v3228 = vpop.f32.mrb[0].mxu0
        %v3229 = vpop.f32.mrb[0].mxu0
        %v3230 = vadd.f32 %v3066, %v3229
        %v3231 = vpop.f32.mrb[0].mxu0
        %3232 = vmatprep.mubr.bf16.mxu0 0
        %3233 = vmatmul.mubr.bf16.gmra.mrb[0].mxu0 %v3104
        %v3234 = vpop.f32.mrb[0].mxu0
        %v3235 = vadd.f32 %v3066, %v3234
        %v3236 = vpop.f32.mrb[0].mxu0
        %v3237 = vpop.f32.mrb[0].mxu0
        %v3238 = vadd.f32 %v3066, %v3237
        %v3239 = vpop.f32.mrb[0].mxu0
        %3240 = vmatprep.mubr.bf16.mxu0 0
        %3241 = vmatmul.mubr.bf16.gmra.mrb[0].mxu0 %v3106
        %v3242 = vpop.f32.mrb[0].mxu0
        %v3243 = vadd.f32 %v3066, %v3242
        %v3244 = vpop.f32.mrb[0].mxu0
        %v3245 = vpop.f32.mrb[0].mxu0
        %v3246 = vadd.f32 %v3066, %v3245
        %v3247 = vpop.f32.mrb[0].mxu0
        %3248 = vmatprep.mubr.bf16.mxu0 0
        %3249 = vmatmul.mubr.bf16.gmra.mrb[0].mxu0 %v3108
        %v3250 = vpop.f32.mrb[0].mxu0
        %v3251 = vadd.f32 %v3066, %v3250
        %v3252 = vpop.f32.mrb[0].mxu0
        %v3253 = vpop.f32.mrb[0].mxu0
        %v3254 = vadd.f32 %v3066, %v3253
        %v3255 = vpop.f32.mrb[0].mxu0
        %3256 = vmatprep.mubr.bf16.mxu0 0
        %3257 = vmatmul.mubr.bf16.gmra.mrb[0].mxu0 %v3110
        %v3258 = vpop.f32.mrb[0].mxu0
        %v3259 = vadd.f32 %v3066, %v3258
        %v3260 = vpop.f32.mrb[0].mxu0
        %v3261 = vpop.f32.mrb[0].mxu0
        %v3262 = vadd.f32 %v3066, %v3261
        %v3263 = vpop.f32.mrb[0].mxu0
        %3264 = vmatprep.mubr.bf16.mxu0 0
        %3265 = vmatmul.mubr.bf16.gmra.mrb[0].mxu0 %v3112
        %v3266 = vpop.f32.mrb[0].mxu0
        %v3267 = vadd.f32 %v3066, %v3266
        %v3268 = vpop.f32.mrb[0].mxu0
        %v3269 = vpop.f32.mrb[0].mxu0
        %v3270 = vadd.f32 %v3066, %v3269
        %v3271 = vpop.f32.mrb[0].mxu0
        %3272 = vmatprep.mubr.bf16.mxu0 0
        %3273 = vmatmul.mubr.bf16.gmra.mrb[0].mxu0 %v3114
        %v3274 = vpop.f32.mrb[0].mxu0
        %v3275 = vadd.f32 %v3066, %v3274
        %v3276 = vpop.f32.mrb[0].mxu0
        %v3277 = vpop.f32.mrb[0].mxu0
        %v3278 = vadd.f32 %v3066, %v3277
        %v3279 = vpop.f32.mrb[0].mxu0
        %3280 = vdwg.mxu0
        %v3281 = vsel %vm2825, %v3155, 0.0
        %v3282 = vsel %vm2825, %v3158, 0.0
        %v3283 = vadd.f32 %v3281, %v3282
        %v3284 = vsel %vm2825, %v3163, 0.0
        %v3285 = vadd.f32 %v3283, %v3284
        %v3286 = vsel %vm2825, %v3166, 0.0
        %v3287 = vadd.f32 %v3285, %v3286
        %v3288 = vsel %vm2825, %v3171, 0.0
        %v3289 = vadd.f32 %v3287, %v3288
        %v3290 = vsel %vm2825, %v3174, 0.0
        %v3291 = vadd.f32 %v3289, %v3290
        %v3292 = vsel %vm2825, %v3179, 0.0
        %v3293 = vadd.f32 %v3291, %v3292
        %v3294 = vsel %vm2825, %v3182, 0.0
        %v3295 = vadd.f32 %v3293, %v3294
        %v3296 = vsel %vm2825, %v3187, 0.0
        %v3297 = vadd.f32 %v3295, %v3296
        %v3298 = vsel %vm2825, %v3190, 0.0
        %v3299 = vadd.f32 %v3297, %v3298
        %v3300 = vsel %vm2825, %v3195, 0.0
        %v3301 = vadd.f32 %v3299, %v3300
        %v3302 = vsel %vm2825, %v3198, 0.0
        %v3303 = vadd.f32 %v3301, %v3302
        %v3304 = vsel %vm2825, %v3203, 0.0
        %v3305 = vadd.f32 %v3303, %v3304
        %v3306 = vsel %vm2825, %v3206, 0.0
        %v3307 = vadd.f32 %v3305, %v3306
        %v3308 = vsel %vm2825, %v3211, 0.0
        %v3309 = vadd.f32 %v3307, %v3308
        %v3310 = vsel %vm2825, %v3214, 0.0
        %v3311 = vadd.f32 %v3309, %v3310
        %v3312 = vsel %vm2825, %v3219, 0.0
        %v3313 = vadd.f32 %v3311, %v3312
        %v3314 = vsel %vm2825, %v3222, 0.0
        %v3315 = vadd.f32 %v3313, %v3314
        %v3316 = vsel %vm2825, %v3227, 0.0
        %v3317 = vadd.f32 %v3315, %v3316
        %v3318 = vsel %vm2825, %v3230, 0.0
        %v3319 = vadd.f32 %v3317, %v3318
        %v3320 = vsel %vm2825, %v3235, 0.0
        %v3321 = vadd.f32 %v3319, %v3320
        %v3322 = vsel %vm2825, %v3238, 0.0
        %v3323 = vadd.f32 %v3321, %v3322
        %v3324 = vsel %vm2825, %v3243, 0.0
        %v3325 = vadd.f32 %v3323, %v3324
        %v3326 = vsel %vm2825, %v3246, 0.0
        %v3327 = vadd.f32 %v3325, %v3326
        %v3328 = vsel %vm2825, %v3251, 0.0
        %v3329 = vadd.f32 %v3327, %v3328
        %v3330 = vsel %vm2825, %v3254, 0.0
        %v3331 = vadd.f32 %v3329, %v3330
        %v3332 = vsel %vm2825, %v3259, 0.0
        %v3333 = vadd.f32 %v3331, %v3332
        %v3334 = vsel %vm2825, %v3262, 0.0
        %v3335 = vadd.f32 %v3333, %v3334
        %v3336 = vsel %vm2825, %v3267, 0.0
        %v3337 = vadd.f32 %v3335, %v3336
        %v3338 = vsel %vm2825, %v3270, 0.0
        %v3339 = vadd.f32 %v3337, %v3338
        %v3340 = vsel %vm2825, %v3275, 0.0
        %v3341 = vadd.f32 %v3339, %v3340
        %v3342 = vsel %vm2825, %v3278, 0.0
        %v3343 = vadd.f32 %v3341, %v3342
        %v3344 = vrot.slane %v3343, 4
        %v3345 = vadd.f32 %v3343, %v3344
        %v3346 = vrot.slane %v3345, 2
        %v3347 = vadd.f32 %v3345, %v3346
        %v3348 = vrot.slane %v3347, 1
        %v3349 = vadd.f32 %v3347, %v3348
        %vm3350 = vcmask 57344
        %3351 = vst.msk [vmem:[%s201] sm:$0x1] %vm3350, %v3349
        %v3352 = vmul.f32 %v3155, %v3155
        %v3353 = vmul.f32 %v3158, %v3158
        %v3354 = vmul.f32 %v3163, %v3163
        %v3355 = vmul.f32 %v3166, %v3166
        %v3356 = vmul.f32 %v3171, %v3171
        %v3357 = vmul.f32 %v3174, %v3174
        %v3358 = vmul.f32 %v3179, %v3179
        %v3359 = vmul.f32 %v3182, %v3182
        %v3360 = vmul.f32 %v3187, %v3187
        %v3361 = vmul.f32 %v3190, %v3190
        %v3362 = vmul.f32 %v3195, %v3195
        %v3363 = vmul.f32 %v3198, %v3198
        %v3364 = vmul.f32 %v3203, %v3203
        %v3365 = vmul.f32 %v3206, %v3206
        %v3366 = vmul.f32 %v3211, %v3211
        %v3367 = vmul.f32 %v3214, %v3214
        %v3368 = vmul.f32 %v3219, %v3219
        %v3369 = vmul.f32 %v3222, %v3222
        %v3370 = vmul.f32 %v3227, %v3227
        %v3371 = vmul.f32 %v3230, %v3230
        %v3372 = vmul.f32 %v3235, %v3235
        %v3373 = vmul.f32 %v3238, %v3238
        %v3374 = vmul.f32 %v3243, %v3243
        %v3375 = vmul.f32 %v3246, %v3246
        %v3376 = vmul.f32 %v3251, %v3251
        %v3377 = vmul.f32 %v3254, %v3254
        %v3378 = vmul.f32 %v3259, %v3259
        %v3379 = vmul.f32 %v3262, %v3262
        %v3380 = vmul.f32 %v3267, %v3267
        %v3381 = vmul.f32 %v3270, %v3270
        %v3382 = vmul.f32 %v3275, %v3275
        %v3383 = vmul.f32 %v3278, %v3278
        %v3384 = vsel %vm2825, %v3352, 0.0
        %v3385 = vsel %vm2825, %v3353, 0.0
        %v3386 = vadd.f32 %v3384, %v3385
        %v3387 = vsel %vm2825, %v3354, 0.0
        %v3388 = vadd.f32 %v3386, %v3387
        %v3389 = vsel %vm2825, %v3355, 0.0
        %v3390 = vadd.f32 %v3388, %v3389
        %v3391 = vsel %vm2825, %v3356, 0.0
        %v3392 = vadd.f32 %v3390, %v3391
        %v3393 = vsel %vm2825, %v3357, 0.0
        %v3394 = vadd.f32 %v3392, %v3393
        %v3395 = vsel %vm2825, %v3358, 0.0
        %v3396 = vadd.f32 %v3394, %v3395
        %v3397 = vsel %vm2825, %v3359, 0.0
        %v3398 = vadd.f32 %v3396, %v3397
        %v3399 = vsel %vm2825, %v3360, 0.0
        %v3400 = vadd.f32 %v3398, %v3399
        %v3401 = vsel %vm2825, %v3361, 0.0
        %v3402 = vadd.f32 %v3400, %v3401
        %v3403 = vsel %vm2825, %v3362, 0.0
        %v3404 = vadd.f32 %v3402, %v3403
        %v3405 = vsel %vm2825, %v3363, 0.0
        %v3406 = vadd.f32 %v3404, %v3405
        %v3407 = vsel %vm2825, %v3364, 0.0
        %v3408 = vadd.f32 %v3406, %v3407
        %v3409 = vsel %vm2825, %v3365, 0.0
        %v3410 = vadd.f32 %v3408, %v3409
        %v3411 = vsel %vm2825, %v3366, 0.0
        %v3412 = vadd.f32 %v3410, %v3411
        %v3413 = vsel %vm2825, %v3367, 0.0
        %v3414 = vadd.f32 %v3412, %v3413
        %v3415 = vsel %vm2825, %v3368, 0.0
        %v3416 = vadd.f32 %v3414, %v3415
        %v3417 = vsel %vm2825, %v3369, 0.0
        %v3418 = vadd.f32 %v3416, %v3417
        %v3419 = vsel %vm2825, %v3370, 0.0
        %v3420 = vadd.f32 %v3418, %v3419
        %v3421 = vsel %vm2825, %v3371, 0.0
        %v3422 = vadd.f32 %v3420, %v3421
        %v3423 = vsel %vm2825, %v3372, 0.0
        %v3424 = vadd.f32 %v3422, %v3423
        %v3425 = vsel %vm2825, %v3373, 0.0
        %v3426 = vadd.f32 %v3424, %v3425
        %v3427 = vsel %vm2825, %v3374, 0.0
        %v3428 = vadd.f32 %v3426, %v3427
        %v3429 = vsel %vm2825, %v3375, 0.0
        %v3430 = vadd.f32 %v3428, %v3429
        %v3431 = vsel %vm2825, %v3376, 0.0
        %v3432 = vadd.f32 %v3430, %v3431
        %v3433 = vsel %vm2825, %v3377, 0.0
        %v3434 = vadd.f32 %v3432, %v3433
        %v3435 = vsel %vm2825, %v3378, 0.0
        %v3436 = vadd.f32 %v3434, %v3435
        %v3437 = vsel %vm2825, %v3379, 0.0
        %v3438 = vadd.f32 %v3436, %v3437
        %v3439 = vsel %vm2825, %v3380, 0.0
        %v3440 = vadd.f32 %v3438, %v3439
        %v3441 = vsel %vm2825, %v3381, 0.0
        %v3442 = vadd.f32 %v3440, %v3441
        %v3443 = vsel %vm2825, %v3382, 0.0
        %v3444 = vadd.f32 %v3442, %v3443
        %v3445 = vsel %vm2825, %v3383, 0.0
        %v3446 = vadd.f32 %v3444, %v3445
        %v3447 = vrot.slane %v3446, 4
        %v3448 = vadd.f32 %v3446, %v3447
        %v3449 = vrot.slane %v3448, 2
        %v3450 = vadd.f32 %v3448, %v3449
        %v3451 = vrot.slane %v3450, 1
        %v3452 = vadd.f32 %v3450, %v3451
        %3453 = vst.msk [vmem:[%s201 + $0x1] sm:$0x1] %vm3350, %v3452
        %3454 = vxpose.xlu0.b32.start [1/16] %v3155, 128
        %3455 = vxpose.xlu0.b32.cont [2/16] %v3158, 128
        %3456 = vxpose.xlu0.b32.cont [3/16] %v3163, 128
        %3457 = vxpose.xlu0.b32.cont [4/16] %v3166, 128
        %3458 = vxpose.xlu0.b32.cont [5/16] %v3171, 128
        %3459 = vxpose.xlu0.b32.cont [6/16] %v3174, 128
        %3460 = vxpose.xlu0.b32.cont [7/16] %v3179, 128
        %3461 = vxpose.xlu0.b32.cont [8/16] %v3182, 128
        %3462 = vxpose.xlu0.b32.cont [9/16] %v3187, 128
        %3463 = vxpose.xlu0.b32.cont [10/16] %v3190, 128
        %3464 = vxpose.xlu0.b32.cont [11/16] %v3195, 128
        %3465 = vxpose.xlu0.b32.cont [12/16] %v3198, 128
        %3466 = vxpose.xlu0.b32.cont [13/16] %v3203, 128
        %3467 = vxpose.xlu0.b32.cont [14/16] %v3206, 128
        %3468 = vxpose.xlu0.b32.cont [15/16] %v3211, 128
        %3469 = vxpose.xlu0.b32.end [16/16] %v3214, 128
        %v3470 = vpop.trf.xlu0
        %v3471 = vpop.trf.xlu0
        %v3472 = vpop.trf.xlu0
        %v3473 = vpop.trf.xlu0
        %v3474 = vpop.trf.xlu0
        %v3475 = vpop.trf.xlu0
        %v3476 = vpop.trf.xlu0
        %v3477 = vpop.trf.xlu0
        %v3478 = vpop.trf.xlu0
        %v3479 = vpop.trf.xlu0
        %v3480 = vpop.trf.xlu0
        %v3481 = vpop.trf.xlu0
        %v3482 = vpop.trf.xlu0
        %v3483 = vpop.trf.xlu0
        %v3484 = vpop.trf.xlu0
        %v3485 = vpop.trf.xlu0
        %3486 = vxpose.xlu0.b32.start [1/16] %v3219, 128
        %3487 = vxpose.xlu0.b32.cont [2/16] %v3222, 128
        %3488 = vxpose.xlu0.b32.cont [3/16] %v3227, 128
        %3489 = vxpose.xlu0.b32.cont [4/16] %v3230, 128
        %3490 = vxpose.xlu0.b32.cont [5/16] %v3235, 128
        %3491 = vxpose.xlu0.b32.cont [6/16] %v3238, 128
        %3492 = vxpose.xlu0.b32.cont [7/16] %v3243, 128
        %3493 = vxpose.xlu0.b32.cont [8/16] %v3246, 128
        %3494 = vxpose.xlu0.b32.cont [9/16] %v3251, 128
        %3495 = vxpose.xlu0.b32.cont [10/16] %v3254, 128
        %3496 = vxpose.xlu0.b32.cont [11/16] %v3259, 128
        %3497 = vxpose.xlu0.b32.cont [12/16] %v3262, 128
        %3498 = vxpose.xlu0.b32.cont [13/16] %v3267, 128
        %3499 = vxpose.xlu0.b32.cont [14/16] %v3270, 128
        %3500 = vxpose.xlu0.b32.cont [15/16] %v3275, 128
        %3501 = vxpose.xlu0.b32.end [16/16] %v3278, 128
        %v3502 = vpop.trf.xlu0
        %v3503 = vpop.trf.xlu0
        %v3504 = vpop.trf.xlu0
        %v3505 = vpop.trf.xlu0
        %v3506 = vpop.trf.xlu0
        %v3507 = vpop.trf.xlu0
        %v3508 = vpop.trf.xlu0
        %v3509 = vpop.trf.xlu0
        %v3510 = vpop.trf.xlu0
        %v3511 = vpop.trf.xlu0
        %v3512 = vpop.trf.xlu0
        %v3513 = vpop.trf.xlu0
        %v3514 = vpop.trf.xlu0
        %v3515 = vpop.trf.xlu0
        %v3516 = vpop.trf.xlu0
        %v3517 = vpop.trf.xlu0
        %v3518 = vpack.c.bf16 %v3470, %v3470
        %v3519 = vpack.c.bf16 %v3502, %v3502
        %v3522 = vunpack.c.l.b16 %v3518
        %v3523 = vunpack.c.l.b16 %v3519
        %v3524 = vpack.c.b16 %v3523, %v3522
        %3526 = vst [vmem:[%s194] sm:$0xff] %v3524
        %s3527 = sand.u32 %s98, 1
        %s3528 = scalar_lea.sflag [#allocation3], %s3527
        %s3529 = sand.u32 %s98, 1
        %s3530 = smul.addr %s3529, 8
        %s3531 = scalar_lea.vmem [#allocation2], %s3530
        %s3532 = sand.u32 %s124, 1
        %s3533 = scalar_lea.sflag [#allocation5], %s3532
        %s3534 = sand.u32 %s124, 1
        %s3535 = smul.addr %s3534, 2
        %s3536 = scalar_lea.vmem [#allocation4], %s3535
        // Predicated region
        $region33: #{tpu_custom_call.1} parent=31 // pred_check
          %p3537 = pneg %p108
        $region34: #{tpu_custom_call.1} parent=31 // pred_check_branch
          %3539 = sbr.rel (%p3537) target = $region36
        $region35: #{tpu_custom_call.1} parent=31 // pred_region
          %s3541 = ssub.s32 128, 128
          %3542 = vsyncadd %s3528, %s3541
          %s3543 = smul.addr %s22, 2
          %s3544 = smul.addr %s3543, 64
          %s3545 = scalar_lea.hbm %s3, %s3544
          %s3547 = sshll.u32 %s3531, 4
          %s3548 = int_to_ptr.vmem [resolvable:$true] %s3547
          %3550 = dma.vmem_to_hbm [thread:$0]  %s3548, 128, %s3545, %s3528
        $region36: #{tpu_custom_call.1} parent=31 // pred_fallthru
          _
        // Predicated region
        $region37: #{tpu_custom_call.1} parent=31 // pred_check
          %p3551 = pneg %p134
        $region38: #{tpu_custom_call.1} parent=31 // pred_check_branch
          %3553 = sbr.rel (%p3551) target = $region40
        $region39: #{tpu_custom_call.1} parent=31 // pred_region
          %s3555 = ssub.s32 32, 32
          %3556 = vsyncadd %s3533, %s3555
          %s3557 = smul.addr %s22, 32
          %s3558 = scalar_lea.hbm %s4, %s3557
          %s3560 = sshll.u32 %s3536, 4
          %s3561 = int_to_ptr.vmem [resolvable:$true] %s3560
          %3563 = dma.vmem_to_hbm [thread:$0]  %s3561, 32, %s3558, %s3533
        $region40: #{tpu_custom_call.1} parent=31 // pred_fallthru
          _
      $region32: #{tpu_custom_call.1} parent=5 // pred_fallthru
        _
      %p3564 = scmp.le.s32.totalorder 2, %s17
      // Predicated region
      $region41: #{tpu_custom_call.1} parent=5 // pred_check
        %p3565 = pneg %p3564
      $region42: #{tpu_custom_call.1} parent=5 // pred_check_branch
        %3567 = sbr.rel (%p3565) target = $region44
      $region43: #{tpu_custom_call.1} parent=5 // pred_region
        %s3568 = ssub.s32 %s17, 2
        // Predicated region
        $region45: #{tpu_custom_call.1} parent=43 // pred_check
          %p3569 = pneg %p114
        $region46: #{tpu_custom_call.1} parent=43 // pred_check_branch
          %3571 = sbr.rel (%p3569) target = $region48
        $region47: #{tpu_custom_call.1} parent=43 // pred_region
          %s3572 = sand.u32 %s99, 1
          %s3573 = scalar_lea.sflag [#allocation3], %s3572
          %s3574 = sand.u32 %s99, 1
          %s3575 = smul.addr %s3574, 8
          %s3576 = scalar_lea.vmem [#allocation2], %s3575
          %3577 = dma.done %s3573, 128
        $region48: #{tpu_custom_call.1} parent=43 // pred_fallthru
          _
        // Predicated region
        $region49: #{tpu_custom_call.1} parent=43 // pred_check
          %p3578 = pneg %p140
        $region50: #{tpu_custom_call.1} parent=43 // pred_check_branch
          %3580 = sbr.rel (%p3578) target = $region52
        $region51: #{tpu_custom_call.1} parent=43 // pred_region
          %s3581 = sand.u32 %s125, 1
          %s3582 = scalar_lea.sflag [#allocation5], %s3581
          %s3583 = sand.u32 %s125, 1
          %s3584 = smul.addr %s3583, 2
          %s3585 = scalar_lea.vmem [#allocation4], %s3584
          %3586 = dma.done %s3582, 32
        $region52: #{tpu_custom_call.1} parent=43 // pred_fallthru
          _
      $region44: #{tpu_custom_call.1} parent=5 // pred_fallthru
        _
    $region6: #{tpu_custom_call.1} parent=1 // loop_footer
      %s21 = sadd.s32 1, %s17
    $region7: #{tpu_custom_call.1} parent=1 // loop_footer_branch
      %16 = sbr.rel target = $region3
    $region8: #{tpu_custom_call.1} parent=1 // loop_exit
      _
    %3587 = vsyncpa [#allocation3], 1
    %s3588 = scalar_lea.sflag [#allocation3], 1
    %3589 = vsyncpa %s3588, 1
    %3590 = vsyncpa [#allocation5], 1
    %s3591 = scalar_lea.sflag [#allocation5], 1
    %3592 = vsyncpa %s3591, 1

</llo_original>
